<compile_context>
chip_gen: v7x
topology: tpu7x:2x2x1
jax: 0.10.0
libtpu: 0.0.40
codegen_flags: <defaults>
</compile_context>

<pallas_src>
import numpy as np
import jax
import jax.numpy as jnp
from jax import lax
from jax.experimental import pallas as pl
from jax.experimental.pallas import tpu as pltpu

TINY = 1e-13          # util.tiny_value_of_dtype(float32) in allennlp
MASK_FILL = -10000.0


def _round_up(x, m):
    return (x + m - 1) // m * m


def _sampled_softmax_kernel(emb_ref, true_w_ref, true_corr_ref,
                            smp_w_ref, smp_corr_ref, tgt_id_ref, smp_id_ref,
                            loss_ref,
                            emb_bf_sc, t_sc, m_sc, l_sc):
    """Grid = (B_tiles, S_tiles).  Online logsumexp over the S axis."""
    si = pl.program_id(1)

    @pl.when(si == 0)
    def _():
        emb = emb_ref[...]                                   # [Bt, D] f32
        emb_bf_sc[...] = emb.astype(jnp.bfloat16)            # cache bf16 cast once per B tile
        # true logit (f32): rowwise dot + folded (bias - log(expected_count+tiny))
        t = jnp.sum(true_w_ref[...] * emb, axis=1, keepdims=True) + true_corr_ref[...]
        t_sc[...] = t
        # seed the online logsumexp with the true logit itself
        m_sc[...] = t
        l_sc[...] = jnp.ones_like(t)

    # sampled logits for this S tile: [Bt, D] x [St, D] contracted on D (no transpose),
    # bf16 operands, f32 accumulation on the MXU.
    s = lax.dot_general(
        emb_bf_sc[...], smp_w_ref[...],
        dimension_numbers=(((1,), (1,)), ((), ())),
        preferred_element_type=jnp.float32)                  # [Bt, St]
    s = s + smp_corr_ref[...]                                # folded bias - log(exp_cnt+tiny)
    s = jnp.where(smp_id_ref[...] == tgt_id_ref[...], MASK_FILL, s)

    # online logsumexp update
    m_prev = m_sc[...]
    m_new = jnp.maximum(m_prev, jnp.max(s, axis=1, keepdims=True))
    l_sc[...] = (l_sc[...] * jnp.exp(m_prev - m_new)
                 + jnp.sum(jnp.exp(s - m_new), axis=1, keepdims=True))
    m_sc[...] = m_new

    @pl.when(si == pl.num_programs(1) - 1)
    def _():
        lse = m_sc[...] + jnp.log(l_sc[...])
        loss_ref[...] = lse - t_sc[...]                      # per-row -log p(true)


def ps_sampled_softmax_loss(embeddings, target_ids, sample_ids,
                            true_e, samples, num_tries, num_embeddings,
                            *, b_tile=128, s_tile=256):
    """Training-mode forward of PSSampledSoftmaxLoss.

    embeddings: [B, D] f32, target_ids: [B] i32, sample_ids: [S] i32,
    true_e: [B, D+1] f32 (col 0 = bias), samples: [S, D+1] f32 (col 0 = bias).
    Returns scalar f32 NLL loss (sum over batch).
    """
    if embeddings.shape[0] == 0:
        return jnp.float32(0.0)

    B, D = embeddings.shape
    S = sample_ids.shape[0]

    # ---- wrapper-side glue (O(B+S), computed once, not per grid step) -------
    inv_log_np1 = np.float32(1.0 / np.log1p(num_embeddings))  # reciprocal -> multiply

    def neg_log_expected_count(ids):
        # NOTE: int32->f32 cast is exact only up to 2^24 (same as torch .float()).
        idf = ids.astype(jnp.float32)
        probs = jnp.log((idf + 2.0) / (idf + 1.0)) * inv_log_np1
        exp_cnt = -jnp.expm1(num_tries * jnp.log1p(-probs))   # without-replacement branch
        return -jnp.log(exp_cnt + TINY)

    true_w = true_e[:, 1:].astype(jnp.float32)                 # [B, D]
    true_b = true_e[:, 0].astype(jnp.float32)                  # [B]
    smp_w = samples[:, 1:].astype(jnp.float32)                 # [S, D]
    smp_b = samples[:, 0].astype(jnp.float32)                  # [S]

    true_corr = (true_b + neg_log_expected_count(target_ids)).reshape(B, 1)
    smp_corr = (smp_b + neg_log_expected_count(sample_ids)).reshape(1, S)

    # ---- tiling / padding ----------------------------------------------------
    b_tile = min(b_tile, _round_up(B, 8))
    s_tile = min(s_tile, _round_up(S, 128))
    B_pad = _round_up(B, b_tile)
    S_pad = _round_up(S, s_tile)
    n_b, n_s = B_pad // b_tile, S_pad // s_tile

    def pad2(x, rows, cols, val=0):
        return jnp.pad(x, ((0, rows - x.shape[0]), (0, cols - x.shape[1])),
                       constant_values=val)

    emb_p = pad2(embeddings.astype(jnp.float32), B_pad, D)
    true_w_p = pad2(true_w, B_pad, D)
    true_corr_p = pad2(true_corr, B_pad, 1)
    smp_w_bf = pad2(smp_w, S_pad, D).astype(jnp.bfloat16)       # halve dominant HBM stream
    smp_corr_p = pad2(smp_corr, 1, S_pad, val=MASK_FILL)        # padded cols contribute 0
    tgt_p = pad2(target_ids.astype(jnp.int32).reshape(B, 1), B_pad, 1, val=-1)
    smp_p = pad2(sample_ids.astype(jnp.int32).reshape(1, S), 1, S_pad, val=-1)

    grid_spec = pltpu.PrefetchScalarGridSpec(
        num_scalar_prefetch=0,
        grid=(n_b, n_s),                                       # S (reduction) innermost
        in_specs=[
            pl.BlockSpec((b_tile, D), lambda bi, si: (bi, 0)),   # embeddings
            pl.BlockSpec((b_tile, D), lambda bi, si: (bi, 0)),   # true_w
            pl.BlockSpec((b_tile, 1), lambda bi, si: (bi, 0)),   # true bias+count corr
            # TODO(synk): consider pipeline_mode=pl.Buffered(3) here if profiling
            # shows the sampled_w DMA still exposed at production S/D.
            pl.BlockSpec((s_tile, D), lambda bi, si: (si, 0)),   # sampled_w (bf16)
            pl.BlockSpec((1, s_tile), lambda bi, si: (0, si)),   # sampled bias+count corr
            pl.BlockSpec((b_tile, 1), lambda bi, si: (bi, 0)),   # target ids
            pl.BlockSpec((1, s_tile), lambda bi, si: (0, si)),   # sample ids
        ],
        out_specs=pl.BlockSpec((b_tile, 1), lambda bi, si: (bi, 0)),
        scratch_shapes=[
            pltpu.VMEM((b_tile, D), jnp.bfloat16),   # cached bf16 embeddings tile
            pltpu.VMEM((b_tile, 1), jnp.float32),    # true logits
            pltpu.VMEM((b_tile, 1), jnp.float32),    # running max
            pltpu.VMEM((b_tile, 1), jnp.float32),    # running sum of exp
        ],
    )

    per_row = pl.pallas_call(
        _sampled_softmax_kernel,
        out_shape=jax.ShapeDtypeStruct((B_pad, 1), jnp.float32),
        grid_spec=grid_spec,
        compiler_params=pltpu.CompilerParams(
            dimension_semantics=("parallel", "arbitrary")),
    )(emb_p, true_w_p, true_corr_p, smp_w_bf, smp_corr_p, tgt_p, smp_p)

    return jnp.sum(per_row[:B, 0])


def _reference_loss(embeddings, target_ids, sample_ids, true_e, samples,
                    num_tries, num_embeddings, matmul_dtype=jnp.float32):
    """Pure-JAX reference matching the PyTorch _forward_train semantics."""
    log_np1 = np.log1p(num_embeddings)

    def expected_count(ids):
        idf = ids.astype(jnp.float32)
        probs = jnp.log((idf + 2.0) / (idf + 1.0)) / log_np1
        return -jnp.expm1(num_tries * jnp.log1p(-probs))

    tgt_cnt = expected_count(target_ids)
    smp_cnt = expected_count(sample_ids)
    true_w, true_b = true_e[:, 1:], true_e[:, 0]
    smp_w, smp_b = samples[:, 1:], samples[:, 0]
    true_logits = (true_w * embeddings).sum(1) + true_b - jnp.log(tgt_cnt + TINY)
    mm = jnp.dot(embeddings.astype(matmul_dtype), smp_w.astype(matmul_dtype).T,
                 preferred_element_type=jnp.float32)
    sampled_logits = mm + smp_b - jnp.log(smp_cnt + TINY)
    mask = sample_ids[None, :] == target_ids[:, None]
    sampled_logits = jnp.where(mask, MASK_FILL, sampled_logits)
    logits = jnp.concatenate([true_logits[:, None], sampled_logits], axis=1)
    log_sm = jax.nn.log_softmax(logits, axis=1)
    return -jnp.sum(log_sm[:, 0])


if __name__ == "__main__":
    # Shapes chosen to exercise multiple B tiles, multiple S tiles and the
    # padding paths, while staying small.
    B = 200                # batch of context embeddings (pads to 2 x 128)
    D = 128                # embedding_dim (lane-dense)
    NUM_EMBEDDINGS = 1024  # vocabulary size (module default)
    S = 320                # num_samples (pads to 2 x 256)
    NUM_TRIES = 400.0      # would normally come from _choice()

    key = jax.random.PRNGKey(0)
    k_emb, k_tbl, k_tgt, k_smp = jax.random.split(key, 4)

    # Deterministic "parameter-server" embedding table: [V, D+1], col 0 = bias.
    table = jax.random.normal(k_tbl, (NUM_EMBEDDINGS, D + 1), jnp.float32) * 0.05
    embeddings = jax.random.normal(k_emb, (B, D), jnp.float32)
    target_ids = jax.random.randint(k_tgt, (B,), 0, NUM_EMBEDDINGS, jnp.int32)
    sample_ids = jax.random.randint(k_smp, (S,), 0, NUM_EMBEDDINGS, jnp.int32)

    true_e = table[target_ids]    # glue: PSEmbedding lookup of target ids
    samples = table[sample_ids]   # glue: pre-pulled sampled embeddings

    loss = ps_sampled_softmax_loss(embeddings, target_ids, sample_ids,
                                   true_e, samples, NUM_TRIES, NUM_EMBEDDINGS)
    loss = jax.block_until_ready(loss)

    # Tight check vs a reference that uses the same bf16 matmul numerics.
    ref_bf16 = jax.block_until_ready(
        _reference_loss(embeddings, target_ids, sample_ids, true_e, samples,
                        NUM_TRIES, NUM_EMBEDDINGS, matmul_dtype=jnp.bfloat16))
    # Loose check vs the full-f32 PyTorch-semantics reference (bf16 MXU error).
    ref_f32 = jax.block_until_ready(
        _reference_loss(embeddings, target_ids, sample_ids, true_e, samples,
                        NUM_TRIES, NUM_EMBEDDINGS, matmul_dtype=jnp.float32))

    np.testing.assert_allclose(np.asarray(loss), np.asarray(ref_bf16),
                               rtol=2e-4, atol=1e-2)
    np.testing.assert_allclose(np.asarray(loss), np.asarray(ref_f32),
                               rtol=2e-3, atol=5e-2)

    # Empty-batch branch of the original forward().
    empty = ps_sampled_softmax_loss(jnp.zeros((0, D), jnp.float32),
                                    jnp.zeros((0,), jnp.int32), sample_ids,
                                    jnp.zeros((0, D + 1), jnp.float32), samples,
                                    NUM_TRIES, NUM_EMBEDDINGS)
    assert float(empty) == 0.0

    # TODO(synk): _forward_eval (full-vocab log_softmax + nll) and the numpy
    # sampling helpers (sample/_choice/estimate_num_tries) are host-side /
    # eval-only paths and are not part of the training hot-path kernel.
    print("KERNEL_OK")
</pallas_src>

<mosaic_0001>
module attributes {stable_mosaic.version = 11 : i64} {
  func.func @_sampled_softmax_kernel(%arg0: i32, %arg1: i32, %arg2: memref<128x128xf32, #tpu.memory_space<vmem>>, %arg3: memref<128x128xf32, #tpu.memory_space<vmem>>, %arg4: memref<128x1xf32, #tpu.memory_space<vmem>>, %arg5: memref<256x128xbf16, #tpu.memory_space<vmem>>, %arg6: memref<1x256xf32, #tpu.memory_space<vmem>>, %arg7: memref<128x1xi32, #tpu.memory_space<vmem>>, %arg8: memref<1x256xi32, #tpu.memory_space<vmem>>, %arg9: memref<128x1xf32, #tpu.memory_space<vmem>>, %arg10: memref<128x128xbf16, #tpu.memory_space<vmem>>, %arg11: memref<128x1xf32, #tpu.memory_space<vmem>>, %arg12: memref<128x1xf32, #tpu.memory_space<vmem>>, %arg13: memref<128x1xf32, #tpu.memory_space<vmem>>) attributes {dimension_semantics = [#tpu.dimension_semantics<parallel>, #tpu.dimension_semantics<arbitrary>], iteration_bounds = array<i64: 2, 2>, scalar_prefetch = 0 : i64, scratch_operands = 4 : i64, tpu.core_type = #tpu.core_type<tc>, window_params = [{transform_indices = @transform_0, window_bounds = array<i64: 128, 128>}, {transform_indices = @transform_1, window_bounds = array<i64: 128, 128>}, {transform_indices = @transform_2, window_bounds = array<i64: 128, 1>}, {transform_indices = @transform_3, window_bounds = array<i64: 256, 128>}, {transform_indices = @transform_4, window_bounds = array<i64: 1, 256>}, {transform_indices = @transform_5, window_bounds = array<i64: 128, 1>}, {transform_indices = @transform_6, window_bounds = array<i64: 1, 256>}, {transform_indices = @transform_7, window_bounds = array<i64: 128, 1>}]} {
    %c0_i32 = arith.constant 0 : i32
    %0 = arith.cmpi eq, %arg1, %c0_i32 : i32
    %1 = arith.extui %0 : i1 to i32
    %c0_i32_0 = arith.constant 0 : i32
    %2 = arith.cmpi ne, %1, %c0_i32_0 : i32
    scf.if %2 {
      %c0_22 = arith.constant 0 : index
      %c0_23 = arith.constant 0 : index
      %35 = vector.load %arg2[%c0_22, %c0_23] : memref<128x128xf32, #tpu.memory_space<vmem>>, vector<128x128xf32>
      %36 = arith.truncf %35 : vector<128x128xf32> to vector<128x128xbf16>
      %c0_24 = arith.constant 0 : index
      %c0_25 = arith.constant 0 : index
      %37 = vector.load %arg10[%c0_24, %c0_25] : memref<128x128xbf16, #tpu.memory_space<vmem>>, vector<128x128xbf16>
      tpu.vector_store %arg10[%c0_24, %c0_25], %36 {strides = array<i32>} : memref<128x128xbf16, #tpu.memory_space<vmem>>, vector<128x128xbf16>,
      %c0_26 = arith.constant 0 : index
      %c0_27 = arith.constant 0 : index
      %38 = vector.load %arg3[%c0_26, %c0_27] : memref<128x128xf32, #tpu.memory_space<vmem>>, vector<128x128xf32>
      %39 = arith.mulf %38, %35 : vector<128x128xf32>
      %cst_28 = arith.constant dense<0.000000e+00> : vector<128xf32>
      %40 = vector.multi_reduction <add>, %39, %cst_28 [1] : vector<128x128xf32> to vector<128xf32>
      %41 = vector.shape_cast %40 : vector<128xf32> to vector<128x1xf32>
      %c0_29 = arith.constant 0 : index
      %c0_30 = arith.constant 0 : index
      %42 = vector.load %arg4[%c0_29, %c0_30] : memref<128x1xf32, #tpu.memory_space<vmem>>, vector<128x1xf32>
      %43 = arith.addf %41, %42 : vector<128x1xf32>
      %c0_31 = arith.constant 0 : index
      %c0_32 = arith.constant 0 : index
      %44 = vector.load %arg11[%c0_31, %c0_32] : memref<128x1xf32, #tpu.memory_space<vmem>>, vector<128x1xf32>
      tpu.vector_store %arg11[%c0_31, %c0_32], %43 {strides = array<i32>} : memref<128x1xf32, #tpu.memory_space<vmem>>, vector<128x1xf32>,
      %c0_33 = arith.constant 0 : index
      %c0_34 = arith.constant 0 : index
      %45 = vector.load %arg12[%c0_33, %c0_34] : memref<128x1xf32, #tpu.memory_space<vmem>>, vector<128x1xf32>
      tpu.vector_store %arg12[%c0_33, %c0_34], %43 {strides = array<i32>} : memref<128x1xf32, #tpu.memory_space<vmem>>, vector<128x1xf32>,
      %cst_35 = arith.constant 1.000000e+00 : f32
      %46 = vector.broadcast %cst_35 : f32 to vector<128x1xf32>
      %c0_36 = arith.constant 0 : index
      %c0_37 = arith.constant 0 : index
      %47 = vector.load %arg13[%c0_36, %c0_37] : memref<128x1xf32, #tpu.memory_space<vmem>>, vector<128x1xf32>
      tpu.vector_store %arg13[%c0_36, %c0_37], %46 {strides = array<i32>} : memref<128x1xf32, #tpu.memory_space<vmem>>, vector<128x1xf32>,
    } else {
    }
    %c0 = arith.constant 0 : index
    %c0_1 = arith.constant 0 : index
    %3 = vector.load %arg10[%c0, %c0_1] : memref<128x128xbf16, #tpu.memory_space<vmem>>, vector<128x128xbf16>
    %c0_2 = arith.constant 0 : index
    %c0_3 = arith.constant 0 : index
    %4 = vector.load %arg5[%c0_2, %c0_3] : memref<256x128xbf16, #tpu.memory_space<vmem>>, vector<256x128xbf16>
    %cst = arith.constant dense<0.000000e+00> : vector<128x256xf32>
    %5 = tpu.matmul %3, %4, %cst {dimension_numbers = #tpu.dot_dimension_numbers<[1], [1], [0], [0], [0, 0, 1, 0], [], []>} : vector<128x128xbf16>, vector<256x128xbf16>, vector<128x256xf32> -> vector<128x256xf32>
    %c0_4 = arith.constant 0 : index
    %c0_5 = arith.constant 0 : index
    %6 = vector.load %arg6[%c0_4, %c0_5] : memref<1x256xf32, #tpu.memory_space<vmem>>, vector<1x256xf32>
    %7 = vector.broadcast %6 : vector<1x256xf32> to vector<128x256xf32>
    %8 = arith.addf %5, %7 : vector<128x256xf32>
    %c0_6 = arith.constant 0 : index
    %c0_7 = arith.constant 0 : index
    %9 = vector.load %arg8[%c0_6, %c0_7] : memref<1x256xi32, #tpu.memory_space<vmem>>, vector<1x256xi32>
    %c0_8 = arith.constant 0 : index
    %c0_9 = arith.constant 0 : index
    %10 = vector.load %arg7[%c0_8, %c0_9] : memref<128x1xi32, #tpu.memory_space<vmem>>, vector<128x1xi32>
    %11 = vector.broadcast %9 : vector<1x256xi32> to vector<128x256xi32>
    %12 = vector.broadcast %10 : vector<128x1xi32> to vector<128x256xi32>
    %13 = arith.cmpi eq, %11, %12 : vector<128x256xi32>
    %cst_10 = arith.constant -1.000000e+04 : f32
    %14 = vector.broadcast %cst_10 : f32 to vector<128x256xf32>
    %15 = arith.select %13, %14, %8 : vector<128x256xi1>, vector<128x256xf32>
    %c0_11 = arith.constant 0 : index
    %c0_12 = arith.constant 0 : index
    %16 = vector.load %arg12[%c0_11, %c0_12] : memref<128x1xf32, #tpu.memory_space<vmem>>, vector<128x1xf32>
    %cst_13 = arith.constant dense<0xFF800000> : vector<128xf32>
    %17 = vector.multi_reduction <maximumf>, %15, %cst_13 [1] : vector<128x256xf32> to vector<128xf32>
    %18 = vector.shape_cast %17 : vector<128xf32> to vector<128x1xf32>
    %19 = arith.maximumf %16, %18 : vector<128x1xf32>
    %c0_14 = arith.constant 0 : index
    %c0_15 = arith.constant 0 : index
    %20 = vector.load %arg13[%c0_14, %c0_15] : memref<128x1xf32, #tpu.memory_space<vmem>>, vector<128x1xf32>
    %21 = arith.subf %16, %19 : vector<128x1xf32>
    %22 = math.exp %21 : vector<128x1xf32>
    %23 = arith.mulf %20, %22 : vector<128x1xf32>
    %24 = vector.broadcast %19 : vector<128x1xf32> to vector<128x256xf32>
    %25 = arith.subf %15, %24 : vector<128x256xf32>
    %26 = math.exp %25 : vector<128x256xf32>
    %cst_16 = arith.constant dense<0.000000e+00> : vector<128xf32>
    %27 = vector.multi_reduction <add>, %26, %cst_16 [1] : vector<128x256xf32> to vector<128xf32>
    %28 = vector.shape_cast %27 : vector<128xf32> to vector<128x1xf32>
    %29 = arith.addf %23, %28 : vector<128x1xf32>
    %c0_17 = arith.constant 0 : index
    %c0_18 = arith.constant 0 : index
    %30 = vector.load %arg13[%c0_17, %c0_18] : memref<128x1xf32, #tpu.memory_space<vmem>>, vector<128x1xf32>
    tpu.vector_store %arg13[%c0_17, %c0_18], %29 {strides = array<i32>} : memref<128x1xf32, #tpu.memory_space<vmem>>, vector<128x1xf32>,
    %c0_19 = arith.constant 0 : index
    %c0_20 = arith.constant 0 : index
    %31 = vector.load %arg12[%c0_19, %c0_20] : memref<128x1xf32, #tpu.memory_space<vmem>>, vector<128x1xf32>
    tpu.vector_store %arg12[%c0_19, %c0_20], %19 {strides = array<i32>} : memref<128x1xf32, #tpu.memory_space<vmem>>, vector<128x1xf32>,
    %c1_i32 = arith.constant 1 : i32
    %32 = arith.cmpi eq, %arg1, %c1_i32 : i32
    %33 = arith.extui %32 : i1 to i32
    %c0_i32_21 = arith.constant 0 : i32
    %34 = arith.cmpi ne, %33, %c0_i32_21 : i32
    scf.if %34 {
      %c0_22 = arith.constant 0 : index
      %c0_23 = arith.constant 0 : index
      %35 = vector.load %arg12[%c0_22, %c0_23] : memref<128x1xf32, #tpu.memory_space<vmem>>, vector<128x1xf32>
      %c0_24 = arith.constant 0 : index
      %c0_25 = arith.constant 0 : index
      %36 = vector.load %arg13[%c0_24, %c0_25] : memref<128x1xf32, #tpu.memory_space<vmem>>, vector<128x1xf32>
      %37 = math.log %36 : vector<128x1xf32>
      %38 = arith.addf %35, %37 : vector<128x1xf32>
      %c0_26 = arith.constant 0 : index
      %c0_27 = arith.constant 0 : index
      %39 = vector.load %arg11[%c0_26, %c0_27] : memref<128x1xf32, #tpu.memory_space<vmem>>, vector<128x1xf32>
      %40 = arith.subf %38, %39 : vector<128x1xf32>
      %c0_28 = arith.constant 0 : index
      %c0_29 = arith.constant 0 : index
      %41 = vector.load %arg9[%c0_28, %c0_29] : memref<128x1xf32, #tpu.memory_space<vmem>>, vector<128x1xf32>
      tpu.vector_store %arg9[%c0_28, %c0_29], %40 {strides = array<i32>} : memref<128x1xf32, #tpu.memory_space<vmem>>, vector<128x1xf32>,
    } else {
    }
    return
  }
  func.func @transform_0(%arg0: i32, %arg1: i32) -> (i32, i32) {
    %c0_i32 = arith.constant 0 : i32
    %c0_i32_0 = arith.constant 0 : i32
    return %arg0, %c0_i32 : i32, i32
  }
  func.func @transform_1(%arg0: i32, %arg1: i32) -> (i32, i32) {
    %c0_i32 = arith.constant 0 : i32
    %c0_i32_0 = arith.constant 0 : i32
    return %arg0, %c0_i32 : i32, i32
  }
  func.func @transform_2(%arg0: i32, %arg1: i32) -> (i32, i32) {
    %c0_i32 = arith.constant 0 : i32
    %c0_i32_0 = arith.constant 0 : i32
    return %arg0, %c0_i32 : i32, i32
  }
  func.func @transform_3(%arg0: i32, %arg1: i32) -> (i32, i32) {
    %c0_i32 = arith.constant 0 : i32
    %c0_i32_0 = arith.constant 0 : i32
    return %arg1, %c0_i32 : i32, i32
  }
  func.func @transform_4(%arg0: i32, %arg1: i32) -> (i32, i32) {
    %c0_i32 = arith.constant 0 : i32
    %c0_i32_0 = arith.constant 0 : i32
    return %c0_i32, %arg1 : i32, i32
  }
  func.func @transform_5(%arg0: i32, %arg1: i32) -> (i32, i32) {
    %c0_i32 = arith.constant 0 : i32
    %c0_i32_0 = arith.constant 0 : i32
    return %arg0, %c0_i32 : i32, i32
  }
  func.func @transform_6(%arg0: i32, %arg1: i32) -> (i32, i32) {
    %c0_i32 = arith.constant 0 : i32
    %c0_i32_0 = arith.constant 0 : i32
    return %c0_i32, %arg1 : i32, i32
  }
  func.func @transform_7(%arg0: i32, %arg1: i32) -> (i32, i32) {
    %c0_i32 = arith.constant 0 : i32
    %c0_i32_0 = arith.constant 0 : i32
    return %arg0, %c0_i32 : i32, i32
  }
}

</mosaic_0001>

<llo_original>
// kernel: tpu_custom_call.1
$region0: #{tpu_custom_call.1}
  #allocation0 [shape = 'u32[]', space=smem, size = 0x4, offset = 0x4, fixed_abs, tag = 'smem constant byte address 0x4 - core index']
  #allocation1 [shape = 'u32[144,128]{1,0:T(1,128)}', space=vmem, size = 0x12000, scoped, tag = 'internal scratch']
  #allocation2 [shape = 'bf16[128,128]{1,0:T(16,128)(2,1)}', space=vmem, size = 0x8000, scoped, tag = 'scratch operand']
  #allocation3 [shape = 'f32[128,1]{1,0:T(8,128)}', space=vmem, size = 0x10000, scoped, tag = 'scratch operand']
  #allocation4 [shape = 'f32[128,1]{1,0:T(8,128)}', space=vmem, size = 0x10000, scoped, tag = 'scratch operand']
  #allocation5 [shape = 'f32[128,1]{1,0:T(8,128)}', space=vmem, size = 0x10000, scoped, tag = 'scratch operand']
  %s0 = inlined_call_operand.vmem [shape: f32[256,128], index: 0, kind: input, shape index: {}]
  %s1 = inlined_call_operand.vmem [shape: f32[256,128], index: 1, kind: input, shape index: {}]
  %s2 = inlined_call_operand.vmem [shape: f32[256,1], index: 2, kind: input, shape index: {}]
  %s3 = inlined_call_operand.hbm [shape: bf16[512,128], index: 3, kind: input, shape index: {}]
  %s4 = inlined_call_operand.vmem [shape: f32[1,512], index: 4, kind: input, shape index: {}]
  %s5 = inlined_call_operand.vmem [shape: s32[256,1], index: 5, kind: input, shape index: {}]
  %s6 = inlined_call_operand.vmem [shape: s32[1,512], index: 6, kind: input, shape index: {}]
  %s7 = inlined_call_operand.vmem [shape: f32[256,1], index: 7, kind: output, shape index: {}]
  %s8 = sld [smem:[#allocation0]]
  $region73: #{tpu_custom_call.1} parent=0
    _
  %s10 = ssub.s32 1, %s8
  %s11 = scalar_select 0, %s10, %s8
  $region1: #{tpu_custom_call.1} parent=0
    #allocation6 [shape = 'u8[131072]{0}', space=vmem, size = 0x20000, scoped, tag = 'input window, operand 3']
    #allocation7 [shape = 's32[2]{0}', space=sflag, size = 0x8, scoped, tag = 'scoped memory for tpu_custom_call.1']
    %12 = vsyncpa [#allocation7], 0
    %s13 = scalar_lea.sflag [#allocation7], 1
    %14 = vsyncpa %s13, 0
    loop: start=0, step=1, limit=6
    $region2: #{tpu_custom_call.1} parent=1 // loop_pre_header
      _
    $region3: #{tpu_custom_call.1} parent=1 // loop_header
      %s16 = sphi 0, %s20
      %p17 = scmp.ge.s32.totalorder %s16, 6
      %s23 = sphi 0, %s35
      %s24 = sphi 0, %s31
      %s25 = sphi 0, %s23
      %s26 = sphi 0, %s24
      %s27 = sphi 0, %s25
      %s28 = sphi 0, %s26
      %s38 = sphi 0, %s40
      %s41 = sphi 0, %s38
      %s42 = sphi 0, %s41
      %s58 = sphi 0, %s42
      %s64 = sphi 0, %s66
      %s67 = sphi 0, %s64
      %s68 = sphi 0, %s67
      %s84 = sphi 0, %s68
      %s90 = sphi 0, %s92
      %s93 = sphi 0, %s90
      %s94 = sphi 0, %s93
      %s110 = sphi 0, %s94
      %s116 = sphi 0, %s118
      %s119 = sphi 0, %s116
      %s120 = sphi 0, %s119
      %s136 = sphi 0, %s120
      %s142 = sphi 0, %s144
      %s145 = sphi 0, %s142
      %s146 = sphi 0, %s145
      %s162 = sphi 0, %s146
      %s168 = sphi 0, %s170
      %s171 = sphi 0, %s168
      %s172 = sphi 0, %s171
      %s188 = sphi 0, %s172
      %s194 = sphi 0, %s196
      %s197 = sphi 0, %s194
      %s198 = sphi 0, %s197
      %s214 = sphi 0, %s198
      %s220 = sphi 0, %s222
      %s223 = sphi 0, %s220
      %s224 = sphi 0, %s223
      %s240 = sphi 0, %s224
    $region4: #{tpu_custom_call.1} parent=1 // loop_header_branch
      %19 = sbr.rel (%p17) target = $region8
    $region5: #{tpu_custom_call.1} parent=1 // loop_body
      %s21 = ssub.s32 %s16, 1
      %s22 = ssub.s32 %s16, 2
      %s29 = sadd.s32 1, %s24
      %p30 = scmp.ge.s32.totalorder %s29, 2
      %s31 = scalar_select %p30, 0, %s29
      %s32 = sadd.s32 1, %s23
      %s33 = scalar_select %p30, %s32, %s23
      %p34 = scmp.ge.s32.totalorder %s33, 2
      %s35 = scalar_select %p34, 0, %s33
      %s36 = ssub.s32 %s23, %s35
      %p37 = scmp.eq.s32.totalorder %s36, 0
      %s39 = sadd.s32 %s38, 1
      %s40 = scalar_select %p37, %s38, %s39
      %p43 = pneg %p37
      %p44 = scmp.eq.s32.totalorder %s16, 3
      %p45 = por %p43, %p44
      %p46 = scmp.ne.s32.totalorder %s38, %s41
      %p47 = scmp.eq.s32.totalorder %s16, 0
      %p48 = por %p46, %p47
      %p49 = scmp.ne.s32.totalorder %s38, %s41
      %p50 = scmp.eq.s32.totalorder %s21, 3
      %p51 = por %p49, %p50
      %p52 = scmp.ne.s32.totalorder %s41, %s42
      %p53 = scmp.eq.s32.totalorder %s21, 0
      %p54 = por %p52, %p53
      %p55 = scmp.ne.s32.totalorder %s41, %s42
      %p56 = scmp.eq.s32.totalorder %s22, 3
      %p57 = por %p55, %p56
      %p59 = scmp.ne.s32.totalorder %s42, %s58
      %p60 = scmp.eq.s32.totalorder %s22, 0
      %p61 = por %p59, %p60
      %s62 = ssub.s32 %s23, %s35
      %p63 = scmp.eq.s32.totalorder %s62, 0
      %s65 = sadd.s32 %s64, 1
      %s66 = scalar_select %p63, %s64, %s65
      %p69 = pneg %p63
      %p70 = scmp.eq.s32.totalorder %s16, 3
      %p71 = por %p69, %p70
      %p72 = scmp.ne.s32.totalorder %s64, %s67
      %p73 = scmp.eq.s32.totalorder %s16, 0
      %p74 = por %p72, %p73
      %p75 = scmp.ne.s32.totalorder %s64, %s67
      %p76 = scmp.eq.s32.totalorder %s21, 3
      %p77 = por %p75, %p76
      %p78 = scmp.ne.s32.totalorder %s67, %s68
      %p79 = scmp.eq.s32.totalorder %s21, 0
      %p80 = por %p78, %p79
      %p81 = scmp.ne.s32.totalorder %s67, %s68
      %p82 = scmp.eq.s32.totalorder %s22, 3
      %p83 = por %p81, %p82
      %p85 = scmp.ne.s32.totalorder %s68, %s84
      %p86 = scmp.eq.s32.totalorder %s22, 0
      %p87 = por %p85, %p86
      %s88 = ssub.s32 %s23, %s35
      %p89 = scmp.eq.s32.totalorder %s88, 0
      %s91 = sadd.s32 %s90, 1
      %s92 = scalar_select %p89, %s90, %s91
      %p95 = pneg %p89
      %p96 = scmp.eq.s32.totalorder %s16, 3
      %p97 = por %p95, %p96
      %p98 = scmp.ne.s32.totalorder %s90, %s93
      %p99 = scmp.eq.s32.totalorder %s16, 0
      %p100 = por %p98, %p99
      %p101 = scmp.ne.s32.totalorder %s90, %s93
      %p102 = scmp.eq.s32.totalorder %s21, 3
      %p103 = por %p101, %p102
      %p104 = scmp.ne.s32.totalorder %s93, %s94
      %p105 = scmp.eq.s32.totalorder %s21, 0
      %p106 = por %p104, %p105
      %p107 = scmp.ne.s32.totalorder %s93, %s94
      %p108 = scmp.eq.s32.totalorder %s22, 3
      %p109 = por %p107, %p108
      %p111 = scmp.ne.s32.totalorder %s94, %s110
      %p112 = scmp.eq.s32.totalorder %s22, 0
      %p113 = por %p111, %p112
      %s114 = ssub.s32 %s24, %s31
      %p115 = scmp.eq.s32.totalorder %s114, 0
      %s117 = sadd.s32 %s116, 1
      %s118 = scalar_select %p115, %s116, %s117
      %p121 = pneg %p115
      %p122 = scmp.eq.s32.totalorder %s16, 3
      %p123 = por %p121, %p122
      %p124 = scmp.ne.s32.totalorder %s116, %s119
      %p125 = scmp.eq.s32.totalorder %s16, 0
      %p126 = por %p124, %p125
      %p127 = scmp.ne.s32.totalorder %s116, %s119
      %p128 = scmp.eq.s32.totalorder %s21, 3
      %p129 = por %p127, %p128
      %p130 = scmp.ne.s32.totalorder %s119, %s120
      %p131 = scmp.eq.s32.totalorder %s21, 0
      %p132 = por %p130, %p131
      %p133 = scmp.ne.s32.totalorder %s119, %s120
      %p134 = scmp.eq.s32.totalorder %s22, 3
      %p135 = por %p133, %p134
      %p137 = scmp.ne.s32.totalorder %s120, %s136
      %p138 = scmp.eq.s32.totalorder %s22, 0
      %p139 = por %p137, %p138
      %s140 = ssub.s32 %s24, %s31
      %p141 = scmp.eq.s32.totalorder %s140, 0
      %s143 = sadd.s32 %s142, 1
      %s144 = scalar_select %p141, %s142, %s143
      %p147 = pneg %p141
      %p148 = scmp.eq.s32.totalorder %s16, 3
      %p149 = por %p147, %p148
      %p150 = scmp.ne.s32.totalorder %s142, %s145
      %p151 = scmp.eq.s32.totalorder %s16, 0
      %p152 = por %p150, %p151
      %p153 = scmp.ne.s32.totalorder %s142, %s145
      %p154 = scmp.eq.s32.totalorder %s21, 3
      %p155 = por %p153, %p154
      %p156 = scmp.ne.s32.totalorder %s145, %s146
      %p157 = scmp.eq.s32.totalorder %s21, 0
      %p158 = por %p156, %p157
      %p159 = scmp.ne.s32.totalorder %s145, %s146
      %p160 = scmp.eq.s32.totalorder %s22, 3
      %p161 = por %p159, %p160
      %p163 = scmp.ne.s32.totalorder %s146, %s162
      %p164 = scmp.eq.s32.totalorder %s22, 0
      %p165 = por %p163, %p164
      %s166 = ssub.s32 %s23, %s35
      %p167 = scmp.eq.s32.totalorder %s166, 0
      %s169 = sadd.s32 %s168, 1
      %s170 = scalar_select %p167, %s168, %s169
      %p173 = pneg %p167
      %p174 = scmp.eq.s32.totalorder %s16, 3
      %p175 = por %p173, %p174
      %p176 = scmp.ne.s32.totalorder %s168, %s171
      %p177 = scmp.eq.s32.totalorder %s16, 0
      %p178 = por %p176, %p177
      %p179 = scmp.ne.s32.totalorder %s168, %s171
      %p180 = scmp.eq.s32.totalorder %s21, 3
      %p181 = por %p179, %p180
      %p182 = scmp.ne.s32.totalorder %s171, %s172
      %p183 = scmp.eq.s32.totalorder %s21, 0
      %p184 = por %p182, %p183
      %p185 = scmp.ne.s32.totalorder %s171, %s172
      %p186 = scmp.eq.s32.totalorder %s22, 3
      %p187 = por %p185, %p186
      %p189 = scmp.ne.s32.totalorder %s172, %s188
      %p190 = scmp.eq.s32.totalorder %s22, 0
      %p191 = por %p189, %p190
      %s192 = ssub.s32 %s24, %s31
      %p193 = scmp.eq.s32.totalorder %s192, 0
      %s195 = sadd.s32 %s194, 1
      %s196 = scalar_select %p193, %s194, %s195
      %p199 = pneg %p193
      %p200 = scmp.eq.s32.totalorder %s16, 3
      %p201 = por %p199, %p200
      %p202 = scmp.ne.s32.totalorder %s194, %s197
      %p203 = scmp.eq.s32.totalorder %s16, 0
      %p204 = por %p202, %p203
      %p205 = scmp.ne.s32.totalorder %s194, %s197
      %p206 = scmp.eq.s32.totalorder %s21, 3
      %p207 = por %p205, %p206
      %p208 = scmp.ne.s32.totalorder %s197, %s198
      %p209 = scmp.eq.s32.totalorder %s21, 0
      %p210 = por %p208, %p209
      %p211 = scmp.ne.s32.totalorder %s197, %s198
      %p212 = scmp.eq.s32.totalorder %s22, 3
      %p213 = por %p211, %p212
      %p215 = scmp.ne.s32.totalorder %s198, %s214
      %p216 = scmp.eq.s32.totalorder %s22, 0
      %p217 = por %p215, %p216
      %s218 = ssub.s32 %s23, %s35
      %p219 = scmp.eq.s32.totalorder %s218, 0
      %s221 = sadd.s32 %s220, 1
      %s222 = scalar_select %p219, %s220, %s221
      %p225 = pneg %p219
      %p226 = scmp.eq.s32.totalorder %s16, 3
      %p227 = por %p225, %p226
      %p228 = scmp.ne.s32.totalorder %s220, %s223
      %p229 = scmp.eq.s32.totalorder %s16, 0
      %p230 = por %p228, %p229
      %p231 = scmp.ne.s32.totalorder %s220, %s223
      %p232 = scmp.eq.s32.totalorder %s21, 3
      %p233 = por %p231, %p232
      %p234 = scmp.ne.s32.totalorder %s223, %s224
      %p235 = scmp.eq.s32.totalorder %s21, 0
      %p236 = por %p234, %p235
      %p237 = scmp.ne.s32.totalorder %s223, %s224
      %p238 = scmp.eq.s32.totalorder %s22, 3
      %p239 = por %p237, %p238
      %p241 = scmp.ne.s32.totalorder %s224, %s240
      %p242 = scmp.eq.s32.totalorder %s22, 0
      %p243 = por %p241, %p242
      %p244 = scmp.le.s32.totalorder 1, %s16
      %p245 = scmp.lt.s32.totalorder %s16, 5
      %p246 = pnand %p244, %p245
      %p247 = pneg %p246
      // Predicated region
      $region9: #{tpu_custom_call.1} parent=5 // pred_check
        _
      $region10: #{tpu_custom_call.1} parent=5 // pred_check_branch
        %249 = sbr.rel (%p246) target = $region12
      $region11: #{tpu_custom_call.1} parent=5 // pred_region
        %s250 = ssub.s32 %s16, 1
      $region12: #{tpu_custom_call.1} parent=5 // pred_fallthru
        _
      %p251 = scmp.lt.s32.totalorder %s16, 4
      // Predicated region
      $region13: #{tpu_custom_call.1} parent=5 // pred_check
        %p252 = pneg %p251
      $region14: #{tpu_custom_call.1} parent=5 // pred_check_branch
        %254 = sbr.rel (%p252) target = $region16
      $region15: #{tpu_custom_call.1} parent=5 // pred_region
        // Predicated region
        $region17: #{tpu_custom_call.1} parent=15 // pred_check
          %p255 = pneg %p48
        $region18: #{tpu_custom_call.1} parent=15 // pred_check_branch
          %257 = sbr.rel (%p255) target = $region20
        $region19: #{tpu_custom_call.1} parent=15 // pred_region
          %s258 = smul.u32 16, %s23
          %p259 = scmp.lt.s32.totalorder %s258, 31
          %s260 = scalar_select %p259, %s258, 31
          %s261 = smul.addr %s260, 8
          %s262 = scalar_lea.vmem %s0, %s261
          %s263 = smul.u32 16, %s23
        $region20: #{tpu_custom_call.1} parent=15 // pred_fallthru
          _
        // Predicated region
        $region21: #{tpu_custom_call.1} parent=15 // pred_check
          %p264 = pneg %p74
        $region22: #{tpu_custom_call.1} parent=15 // pred_check_branch
          %266 = sbr.rel (%p264) target = $region24
        $region23: #{tpu_custom_call.1} parent=15 // pred_region
          %s267 = smul.u32 16, %s23
          %p268 = scmp.lt.s32.totalorder %s267, 31
          %s269 = scalar_select %p268, %s267, 31
          %s270 = smul.addr %s269, 8
          %s271 = scalar_lea.vmem %s1, %s270
          %s272 = smul.u32 16, %s23
        $region24: #{tpu_custom_call.1} parent=15 // pred_fallthru
          _
        // Predicated region
        $region25: #{tpu_custom_call.1} parent=15 // pred_check
          %p273 = pneg %p100
        $region26: #{tpu_custom_call.1} parent=15 // pred_check_branch
          %275 = sbr.rel (%p273) target = $region28
        $region27: #{tpu_custom_call.1} parent=15 // pred_region
          %s276 = smul.u32 16, %s23
          %p277 = scmp.lt.s32.totalorder %s276, 31
          %s278 = scalar_select %p277, %s276, 31
          %s279 = smul.addr %s278, 8
          %s280 = scalar_lea.vmem %s2, %s279
          %s281 = smul.u32 16, %s23
        $region28: #{tpu_custom_call.1} parent=15 // pred_fallthru
          _
        // Predicated region
        $region29: #{tpu_custom_call.1} parent=15 // pred_check
          %p282 = pneg %p126
        $region30: #{tpu_custom_call.1} parent=15 // pred_check_branch
          %284 = sbr.rel (%p282) target = $region32
        $region31: #{tpu_custom_call.1} parent=15 // pred_region
          %s285 = sand.u32 %s116, 1
          %s286 = scalar_lea.sflag [#allocation7], %s285
          %s287 = sand.u32 %s116, 1
          %s288 = smul.addr %s287, 128
          %s289 = scalar_lea.vmem [#allocation6], %s288
          %s290 = smul.u32 32, %s24
          %s292 = ssub.s32 2048, 2048
          %293 = vsyncadd %s286, %s292
          %s294 = smul.addr %s290, 64
          %s295 = scalar_lea.hbm %s3, %s294
          %s296 = sshll.u32 %s289, 4
          %s297 = int_to_ptr.vmem [resolvable:$true] %s296
          %302 = dma.hbm_to_vmem [thread:$0]  %s295, 2048, %s297, %s286, 64, 64, 4
        $region32: #{tpu_custom_call.1} parent=15 // pred_fallthru
          _
        // Predicated region
        $region33: #{tpu_custom_call.1} parent=15 // pred_check
          %p303 = pneg %p152
        $region34: #{tpu_custom_call.1} parent=15 // pred_check_branch
          %305 = sbr.rel (%p303) target = $region36
        $region35: #{tpu_custom_call.1} parent=15 // pred_region
          %s306 = smul.u32 2, %s24
          %p307 = scmp.lt.s32.totalorder %s306, 3
          %s308 = scalar_select %p307, %s306, 3
          %s309 = scalar_lea.vmem %s4, %s308
          %s310 = smul.u32 2, %s24
        $region36: #{tpu_custom_call.1} parent=15 // pred_fallthru
          _
        // Predicated region
        $region37: #{tpu_custom_call.1} parent=15 // pred_check
          %p311 = pneg %p178
        $region38: #{tpu_custom_call.1} parent=15 // pred_check_branch
          %313 = sbr.rel (%p311) target = $region40
        $region39: #{tpu_custom_call.1} parent=15 // pred_region
          %s314 = smul.u32 16, %s23
          %p315 = scmp.lt.s32.totalorder %s314, 31
          %s316 = scalar_select %p315, %s314, 31
          %s317 = smul.addr %s316, 8
          %s318 = scalar_lea.vmem %s5, %s317
          %s319 = smul.u32 16, %s23
        $region40: #{tpu_custom_call.1} parent=15 // pred_fallthru
          _
        // Predicated region
        $region41: #{tpu_custom_call.1} parent=15 // pred_check
          %p320 = pneg %p204
        $region42: #{tpu_custom_call.1} parent=15 // pred_check_branch
          %322 = sbr.rel (%p320) target = $region44
        $region43: #{tpu_custom_call.1} parent=15 // pred_region
          %s323 = smul.u32 2, %s24
          %p324 = scmp.lt.s32.totalorder %s323, 3
          %s325 = scalar_select %p324, %s323, 3
          %s326 = scalar_lea.vmem %s6, %s325
          %s327 = smul.u32 2, %s24
        $region44: #{tpu_custom_call.1} parent=15 // pred_fallthru
          _
      $region16: #{tpu_custom_call.1} parent=5 // pred_fallthru
        _
      %p328 = scmp.le.s32.totalorder 1, %s16
      %p329 = scmp.lt.s32.totalorder %s16, 5
      %p330 = pnand %p328, %p329
      %p331 = pneg %p330
      // Predicated region
      $region45: #{tpu_custom_call.1} parent=5 // pred_check
        _
      $region46: #{tpu_custom_call.1} parent=5 // pred_check_branch
        %333 = sbr.rel (%p330) target = $region48
      $region47: #{tpu_custom_call.1} parent=5 // pred_region
        %s334 = ssub.s32 %s16, 1
        %s335 = sand.u32 %s119, 1
        %s336 = scalar_lea.sflag [#allocation7], %s335
        %s337 = sand.u32 %s119, 1
        %s338 = smul.addr %s337, 128
        %s339 = scalar_lea.vmem [#allocation6], %s338
        // Predicated region
        $region49: #{tpu_custom_call.1} parent=47 // pred_check
          %p340 = pneg %p132
        $region50: #{tpu_custom_call.1} parent=47 // pred_check_branch
          %342 = sbr.rel (%p340) target = $region52
        $region51: #{tpu_custom_call.1} parent=47 // pred_region
          %343 = dma.done %s336, 2048
        $region52: #{tpu_custom_call.1} parent=47 // pred_fallthru
          _
        %s344 = smul.u32 16, %s25
        %p345 = scmp.lt.s32.totalorder %s344, 31
        %s346 = scalar_select %p345, %s344, 31
        %s347 = smul.addr %s346, 8
        %s348 = scalar_lea.vmem %s0, %s347
        %p349 = pneg %p54
        %p350 = pneg %p51
        %s351 = smul.u32 16, %s25
        %p352 = scmp.lt.s32.totalorder %s351, 31
        %s353 = scalar_select %p352, %s351, 31
        %s354 = smul.addr %s353, 8
        %s355 = scalar_lea.vmem %s1, %s354
        %p356 = pneg %p80
        %p357 = pneg %p77
        %s358 = smul.u32 16, %s25
        %p359 = scmp.lt.s32.totalorder %s358, 31
        %s360 = scalar_select %p359, %s358, 31
        %s361 = smul.addr %s360, 8
        %s362 = scalar_lea.vmem %s2, %s361
        %p363 = pneg %p106
        %p364 = pneg %p103
        %s365 = sand.u32 %s119, 1
        %s366 = scalar_lea.sflag [#allocation7], %s365
        %s367 = sand.u32 %s119, 1
        %s368 = smul.addr %s367, 128
        %s369 = scalar_lea.vmem [#allocation6], %s368
        %p370 = pneg %p132
        %p371 = pneg %p129
        %s372 = smul.u32 2, %s26
        %p373 = scmp.lt.s32.totalorder %s372, 3
        %s374 = scalar_select %p373, %s372, 3
        %s375 = scalar_lea.vmem %s4, %s374
        %p376 = pneg %p158
        %p377 = pneg %p155
        %s378 = smul.u32 16, %s25
        %p379 = scmp.lt.s32.totalorder %s378, 31
        %s380 = scalar_select %p379, %s378, 31
        %s381 = smul.addr %s380, 8
        %s382 = scalar_lea.vmem %s5, %s381
        %p383 = pneg %p184
        %p384 = pneg %p181
        %s385 = smul.u32 2, %s26
        %p386 = scmp.lt.s32.totalorder %s385, 3
        %s387 = scalar_select %p386, %s385, 3
        %s388 = scalar_lea.vmem %s6, %s387
        %p389 = pneg %p210
        %p390 = pneg %p207
        %p391 = pneg %p236
        %p392 = pneg %p233
        %s393 = smul.u32 16, %s25
        %p394 = scmp.lt.s32.totalorder %s393, 31
        %s395 = scalar_select %p394, %s393, 31
        %s396 = smul.addr %s395, 8
        %s397 = scalar_lea.vmem %s7, %s396
        %s398 = smul.u32 16, %s25
        %p399 = scmp.lt.s32.totalorder %s398, 31
        %s400 = scalar_select %p399, %s398, 31
        %s401 = smul.addr %s400, 8
        %s402 = scalar_lea.vmem %s0, %s401
        %s403 = smul.u32 16, %s25
        %s404 = smul.u32 16, %s25
        %p405 = scmp.lt.s32.totalorder %s404, 31
        %s406 = scalar_select %p405, %s404, 31
        %s407 = smul.addr %s406, 8
        %s408 = scalar_lea.vmem %s1, %s407
        %s409 = smul.u32 16, %s25
        %s410 = smul.u32 16, %s25
        %p411 = scmp.lt.s32.totalorder %s410, 31
        %s412 = scalar_select %p411, %s410, 31
        %s413 = smul.addr %s412, 8
        %s414 = scalar_lea.vmem %s2, %s413
        %s415 = smul.u32 16, %s25
        %s416 = smul.u32 32, %s26
        %s417 = smul.u32 2, %s26
        %p418 = scmp.lt.s32.totalorder %s417, 3
        %s419 = scalar_select %p418, %s417, 3
        %s420 = scalar_lea.vmem %s4, %s419
        %s421 = smul.u32 2, %s26
        %s422 = smul.u32 16, %s25
        %p423 = scmp.lt.s32.totalorder %s422, 31
        %s424 = scalar_select %p423, %s422, 31
        %s425 = smul.addr %s424, 8
        %s426 = scalar_lea.vmem %s5, %s425
        %s427 = smul.u32 16, %s25
        %s428 = smul.u32 2, %s26
        %p429 = scmp.lt.s32.totalorder %s428, 3
        %s430 = scalar_select %p429, %s428, 3
        %s431 = scalar_lea.vmem %s6, %s430
        %s432 = smul.u32 2, %s26
        %s433 = smul.u32 16, %s25
        %p434 = scmp.lt.s32.totalorder %s433, 31
        %s435 = scalar_select %p434, %s433, 31
        %s436 = smul.addr %s435, 8
        %s437 = scalar_lea.vmem %s7, %s436
        %s438 = smul.u32 16, %s25
        %p440 = scmp.eq.s32.totalorder %s26, 0
        // Predicated region
        $region53: #{tpu_custom_call.1} parent=47 // pred_check
          %p441 = pneg %p440
        $region54: #{tpu_custom_call.1} parent=47 // pred_check_branch
          %443 = sbr.rel (%p441) target = $region56
        $region55: #{tpu_custom_call.1} parent=47 // pred_region
          %v444 = vld [vmem:[%s402] sm:$0xff]
          %v445 = vld [vmem:[%s402 + $0x8] sm:$0xff]
          %v446 = vld [vmem:[%s402 + $0x10] sm:$0xff]
          %v447 = vld [vmem:[%s402 + $0x18] sm:$0xff]
          %v448 = vld [vmem:[%s402 + $0x20] sm:$0xff]
          %v449 = vld [vmem:[%s402 + $0x28] sm:$0xff]
          %v450 = vld [vmem:[%s402 + $0x30] sm:$0xff]
          %v451 = vld [vmem:[%s402 + $0x38] sm:$0xff]
          %v452 = vld [vmem:[%s402 + $0x40] sm:$0xff]
          %v453 = vld [vmem:[%s402 + $0x48] sm:$0xff]
          %v454 = vld [vmem:[%s402 + $0x50] sm:$0xff]
          %v455 = vld [vmem:[%s402 + $0x58] sm:$0xff]
          %v456 = vld [vmem:[%s402 + $0x60] sm:$0xff]
          %v457 = vld [vmem:[%s402 + $0x68] sm:$0xff]
          %v458 = vld [vmem:[%s402 + $0x70] sm:$0xff]
          %v459 = vld [vmem:[%s402 + $0x78] sm:$0xff]
          %v460 = vpack.c.bf16 %v445, %v444
          %v461 = vpack.c.bf16 %v447, %v446
          %v462 = vpack.c.bf16 %v449, %v448
          %v463 = vpack.c.bf16 %v451, %v450
          %v464 = vpack.c.bf16 %v453, %v452
          %v465 = vpack.c.bf16 %v455, %v454
          %v466 = vpack.c.bf16 %v457, %v456
          %v467 = vpack.c.bf16 %v459, %v458
          %468 = vst [vmem:[#allocation2] sm:$0xff] %v460
          %469 = vst [vmem:[#allocation2 + $0x8] sm:$0xff] %v461
          %470 = vst [vmem:[#allocation2 + $0x10] sm:$0xff] %v462
          %471 = vst [vmem:[#allocation2 + $0x18] sm:$0xff] %v463
          %472 = vst [vmem:[#allocation2 + $0x20] sm:$0xff] %v464
          %473 = vst [vmem:[#allocation2 + $0x28] sm:$0xff] %v465
          %474 = vst [vmem:[#allocation2 + $0x30] sm:$0xff] %v466
          %475 = vst [vmem:[#allocation2 + $0x38] sm:$0xff] %v467
          %v476 = vld [vmem:[%s408] sm:$0xff]
          %v477 = vld [vmem:[%s408 + $0x8] sm:$0xff]
          %v478 = vld [vmem:[%s408 + $0x10] sm:$0xff]
          %v479 = vld [vmem:[%s408 + $0x18] sm:$0xff]
          %v480 = vld [vmem:[%s408 + $0x20] sm:$0xff]
          %v481 = vld [vmem:[%s408 + $0x28] sm:$0xff]
          %v482 = vld [vmem:[%s408 + $0x30] sm:$0xff]
          %v483 = vld [vmem:[%s408 + $0x38] sm:$0xff]
          %v484 = vld [vmem:[%s408 + $0x40] sm:$0xff]
          %v485 = vld [vmem:[%s408 + $0x48] sm:$0xff]
          %v486 = vld [vmem:[%s408 + $0x50] sm:$0xff]
          %v487 = vld [vmem:[%s408 + $0x58] sm:$0xff]
          %v488 = vld [vmem:[%s408 + $0x60] sm:$0xff]
          %v489 = vld [vmem:[%s408 + $0x68] sm:$0xff]
          %v490 = vld [vmem:[%s408 + $0x70] sm:$0xff]
          %v491 = vld [vmem:[%s408 + $0x78] sm:$0xff]
          %v492 = vmul.f32 %v476, %v444
          %v493 = vmul.f32 %v477, %v445
          %v494 = vmul.f32 %v478, %v446
          %v495 = vmul.f32 %v479, %v447
          %v496 = vmul.f32 %v480, %v448
          %v497 = vmul.f32 %v481, %v449
          %v498 = vmul.f32 %v482, %v450
          %v499 = vmul.f32 %v483, %v451
          %v500 = vmul.f32 %v484, %v452
          %v501 = vmul.f32 %v485, %v453
          %v502 = vmul.f32 %v486, %v454
          %v503 = vmul.f32 %v487, %v455
          %v504 = vmul.f32 %v488, %v456
          %v505 = vmul.f32 %v489, %v457
          %v506 = vmul.f32 %v490, %v458
          %v507 = vmul.f32 %v491, %v459
          %508 = vadd.xlane.f32.xlu0 %v492
          %v509 = vpop.xlane.xlu0 %508
          %510 = vadd.xlane.f32.xlu0 %v493
          %v511 = vpop.xlane.xlu0 %510
          %512 = vadd.xlane.f32.xlu0 %v494
          %v513 = vpop.xlane.xlu0 %512
          %514 = vadd.xlane.f32.xlu0 %v495
          %v515 = vpop.xlane.xlu0 %514
          %516 = vadd.xlane.f32.xlu0 %v496
          %v517 = vpop.xlane.xlu0 %516
          %518 = vadd.xlane.f32.xlu0 %v497
          %v519 = vpop.xlane.xlu0 %518
          %520 = vadd.xlane.f32.xlu0 %v498
          %v521 = vpop.xlane.xlu0 %520
          %522 = vadd.xlane.f32.xlu0 %v499
          %v523 = vpop.xlane.xlu0 %522
          %524 = vadd.xlane.f32.xlu0 %v500
          %v525 = vpop.xlane.xlu0 %524
          %526 = vadd.xlane.f32.xlu0 %v501
          %v527 = vpop.xlane.xlu0 %526
          %528 = vadd.xlane.f32.xlu0 %v502
          %v529 = vpop.xlane.xlu0 %528
          %530 = vadd.xlane.f32.xlu0 %v503
          %v531 = vpop.xlane.xlu0 %530
          %532 = vadd.xlane.f32.xlu0 %v504
          %v533 = vpop.xlane.xlu0 %532
          %534 = vadd.xlane.f32.xlu0 %v505
          %v535 = vpop.xlane.xlu0 %534
          %536 = vadd.xlane.f32.xlu0 %v506
          %v537 = vpop.xlane.xlu0 %536
          %538 = vadd.xlane.f32.xlu0 %v507
          %v539 = vpop.xlane.xlu0 %538
          %v540 = vld [vmem:[%s414] sm:$0xff]
          %v541 = vld [vmem:[%s414 + $0x8] sm:$0xff]
          %v542 = vld [vmem:[%s414 + $0x10] sm:$0xff]
          %v543 = vld [vmem:[%s414 + $0x18] sm:$0xff]
          %v544 = vld [vmem:[%s414 + $0x20] sm:$0xff]
          %v545 = vld [vmem:[%s414 + $0x28] sm:$0xff]
          %v546 = vld [vmem:[%s414 + $0x30] sm:$0xff]
          %v547 = vld [vmem:[%s414 + $0x38] sm:$0xff]
          %v548 = vld [vmem:[%s414 + $0x40] sm:$0xff]
          %v549 = vld [vmem:[%s414 + $0x48] sm:$0xff]
          %v550 = vld [vmem:[%s414 + $0x50] sm:$0xff]
          %v551 = vld [vmem:[%s414 + $0x58] sm:$0xff]
          %v552 = vld [vmem:[%s414 + $0x60] sm:$0xff]
          %v553 = vld [vmem:[%s414 + $0x68] sm:$0xff]
          %v554 = vld [vmem:[%s414 + $0x70] sm:$0xff]
          %v555 = vld [vmem:[%s414 + $0x78] sm:$0xff]
          %v556 = vadd.f32 %v509, %v540
          %v557 = vadd.f32 %v511, %v541
          %v558 = vadd.f32 %v513, %v542
          %v559 = vadd.f32 %v515, %v543
          %v560 = vadd.f32 %v517, %v544
          %v561 = vadd.f32 %v519, %v545
          %v562 = vadd.f32 %v521, %v546
          %v563 = vadd.f32 %v523, %v547
          %v564 = vadd.f32 %v525, %v548
          %v565 = vadd.f32 %v527, %v549
          %v566 = vadd.f32 %v529, %v550
          %v567 = vadd.f32 %v531, %v551
          %v568 = vadd.f32 %v533, %v552
          %v569 = vadd.f32 %v535, %v553
          %v570 = vadd.f32 %v537, %v554
          %v571 = vadd.f32 %v539, %v555
          %vm572 = vcmask 7168
          %573 = vst.msk [vmem:[#allocation3] sm:$0xff] %vm572, %v556
          %574 = vst.msk [vmem:[#allocation3 + $0x8] sm:$0xff] %vm572, %v557
          %575 = vst.msk [vmem:[#allocation3 + $0x10] sm:$0xff] %vm572, %v558
          %576 = vst.msk [vmem:[#allocation3 + $0x18] sm:$0xff] %vm572, %v559
          %577 = vst.msk [vmem:[#allocation3 + $0x20] sm:$0xff] %vm572, %v560
          %578 = vst.msk [vmem:[#allocation3 + $0x28] sm:$0xff] %vm572, %v561
          %579 = vst.msk [vmem:[#allocation3 + $0x30] sm:$0xff] %vm572, %v562
          %580 = vst.msk [vmem:[#allocation3 + $0x38] sm:$0xff] %vm572, %v563
          %581 = vst.msk [vmem:[#allocation3 + $0x40] sm:$0xff] %vm572, %v564
          %582 = vst.msk [vmem:[#allocation3 + $0x48] sm:$0xff] %vm572, %v565
          %583 = vst.msk [vmem:[#allocation3 + $0x50] sm:$0xff] %vm572, %v566
          %584 = vst.msk [vmem:[#allocation3 + $0x58] sm:$0xff] %vm572, %v567
          %585 = vst.msk [vmem:[#allocation3 + $0x60] sm:$0xff] %vm572, %v568
          %586 = vst.msk [vmem:[#allocation3 + $0x68] sm:$0xff] %vm572, %v569
          %587 = vst.msk [vmem:[#allocation3 + $0x70] sm:$0xff] %vm572, %v570
          %588 = vst.msk [vmem:[#allocation3 + $0x78] sm:$0xff] %vm572, %v571
          %589 = vst.msk [vmem:[#allocation4] sm:$0xff] %vm572, %v556
          %590 = vst.msk [vmem:[#allocation4 + $0x8] sm:$0xff] %vm572, %v557
          %591 = vst.msk [vmem:[#allocation4 + $0x10] sm:$0xff] %vm572, %v558
          %592 = vst.msk [vmem:[#allocation4 + $0x18] sm:$0xff] %vm572, %v559
          %593 = vst.msk [vmem:[#allocation4 + $0x20] sm:$0xff] %vm572, %v560
          %594 = vst.msk [vmem:[#allocation4 + $0x28] sm:$0xff] %vm572, %v561
          %595 = vst.msk [vmem:[#allocation4 + $0x30] sm:$0xff] %vm572, %v562
          %596 = vst.msk [vmem:[#allocation4 + $0x38] sm:$0xff] %vm572, %v563
          %597 = vst.msk [vmem:[#allocation4 + $0x40] sm:$0xff] %vm572, %v564
          %598 = vst.msk [vmem:[#allocation4 + $0x48] sm:$0xff] %vm572, %v565
          %599 = vst.msk [vmem:[#allocation4 + $0x50] sm:$0xff] %vm572, %v566
          %600 = vst.msk [vmem:[#allocation4 + $0x58] sm:$0xff] %vm572, %v567
          %601 = vst.msk [vmem:[#allocation4 + $0x60] sm:$0xff] %vm572, %v568
          %602 = vst.msk [vmem:[#allocation4 + $0x68] sm:$0xff] %vm572, %v569
          %603 = vst.msk [vmem:[#allocation4 + $0x70] sm:$0xff] %vm572, %v570
          %604 = vst.msk [vmem:[#allocation4 + $0x78] sm:$0xff] %vm572, %v571
          %605 = vst.msk [vmem:[#allocation5] sm:$0xff] %vm572, 1.0
          %606 = vst.msk [vmem:[#allocation5 + $0x8] sm:$0xff] %vm572, 1.0
          %607 = vst.msk [vmem:[#allocation5 + $0x10] sm:$0xff] %vm572, 1.0
          %608 = vst.msk [vmem:[#allocation5 + $0x18] sm:$0xff] %vm572, 1.0
          %609 = vst.msk [vmem:[#allocation5 + $0x20] sm:$0xff] %vm572, 1.0
          %610 = vst.msk [vmem:[#allocation5 + $0x28] sm:$0xff] %vm572, 1.0
          %611 = vst.msk [vmem:[#allocation5 + $0x30] sm:$0xff] %vm572, 1.0
          %612 = vst.msk [vmem:[#allocation5 + $0x38] sm:$0xff] %vm572, 1.0
          %613 = vst.msk [vmem:[#allocation5 + $0x40] sm:$0xff] %vm572, 1.0
          %614 = vst.msk [vmem:[#allocation5 + $0x48] sm:$0xff] %vm572, 1.0
          %615 = vst.msk [vmem:[#allocation5 + $0x50] sm:$0xff] %vm572, 1.0
          %616 = vst.msk [vmem:[#allocation5 + $0x58] sm:$0xff] %vm572, 1.0
          %617 = vst.msk [vmem:[#allocation5 + $0x60] sm:$0xff] %vm572, 1.0
          %618 = vst.msk [vmem:[#allocation5 + $0x68] sm:$0xff] %vm572, 1.0
          %619 = vst.msk [vmem:[#allocation5 + $0x70] sm:$0xff] %vm572, 1.0
          %620 = vst.msk [vmem:[#allocation5 + $0x78] sm:$0xff] %vm572, 1.0
        $region56: #{tpu_custom_call.1} parent=47 // pred_fallthru
          _
        %v621 = vld [vmem:[#allocation2] sm:$0xff]
        %v622 = vld [vmem:[#allocation2 + $0x8] sm:$0xff]
        %v623 = vld [vmem:[#allocation2 + $0x10] sm:$0xff]
        %v624 = vld [vmem:[#allocation2 + $0x18] sm:$0xff]
        %v625 = vld [vmem:[#allocation2 + $0x20] sm:$0xff]
        %v626 = vld [vmem:[#allocation2 + $0x28] sm:$0xff]
        %v627 = vld [vmem:[#allocation2 + $0x30] sm:$0xff]
        %v628 = vld [vmem:[#allocation2 + $0x38] sm:$0xff]
        %v629 = vld [vmem:[%s339] sm:$0xf]
        %v630 = vld [vmem:[%s339 + $0x4] sm:$0xf]
        %v631 = vld [vmem:[%s339 + $0x8] sm:$0xf]
        %v632 = vld [vmem:[%s339 + $0xc] sm:$0xf]
        %v633 = vld [vmem:[%s339 + $0x10] sm:$0xf]
        %v634 = vld [vmem:[%s339 + $0x14] sm:$0xf]
        %v635 = vld [vmem:[%s339 + $0x18] sm:$0xf]
        %v636 = vld [vmem:[%s339 + $0x1c] sm:$0xf]
        %v637 = vld [vmem:[%s339 + $0x20] sm:$0xf]
        %v638 = vld [vmem:[%s339 + $0x24] sm:$0xf]
        %v639 = vld [vmem:[%s339 + $0x28] sm:$0xf]
        %v640 = vld [vmem:[%s339 + $0x2c] sm:$0xf]
        %v641 = vld [vmem:[%s339 + $0x30] sm:$0xf]
        %v642 = vld [vmem:[%s339 + $0x34] sm:$0xf]
        %v643 = vld [vmem:[%s339 + $0x38] sm:$0xf]
        %v644 = vld [vmem:[%s339 + $0x3c] sm:$0xf]
        %v645 = vld [vmem:[%s339 + $0x40] sm:$0xf]
        %v646 = vld [vmem:[%s339 + $0x44] sm:$0xf]
        %v647 = vld [vmem:[%s339 + $0x48] sm:$0xf]
        %v648 = vld [vmem:[%s339 + $0x4c] sm:$0xf]
        %v649 = vld [vmem:[%s339 + $0x50] sm:$0xf]
        %v650 = vld [vmem:[%s339 + $0x54] sm:$0xf]
        %v651 = vld [vmem:[%s339 + $0x58] sm:$0xf]
        %v652 = vld [vmem:[%s339 + $0x5c] sm:$0xf]
        %v653 = vld [vmem:[%s339 + $0x60] sm:$0xf]
        %v654 = vld [vmem:[%s339 + $0x64] sm:$0xf]
        %v655 = vld [vmem:[%s339 + $0x68] sm:$0xf]
        %v656 = vld [vmem:[%s339 + $0x6c] sm:$0xf]
        %v657 = vld [vmem:[%s339 + $0x70] sm:$0xf]
        %v658 = vld [vmem:[%s339 + $0x74] sm:$0xf]
        %v659 = vld [vmem:[%s339 + $0x78] sm:$0xf]
        %v660 = vld [vmem:[%s339 + $0x7c] sm:$0xf]
        %v661 = vld [vmem:[%s420] sm:$0x3]
        %v663 = vlaneseq
        %v664 = vshrl.u32 %v663, 7
        %v665 = vsub.s32 0, %v664
        %v666 = vrot.slane %v661, %v665
        %v667 = vlaneseq
        %v668 = vshrl.u32 %v667, 7
        %v669 = vsub.s32 1, %v668
        %v670 = vrot.slane %v661, %v669
        %v705 = vunpack.c.l.b16 %v629
        %v706 = vunpack.c.l.b16 %v630
        %v707 = vunpack.c.l.b16 %v631
        %v708 = vunpack.c.l.b16 %v632
        %v709 = vunpack.c.l.b16 %v633
        %v710 = vunpack.c.l.b16 %v634
        %v711 = vunpack.c.l.b16 %v635
        %v712 = vunpack.c.l.b16 %v636
        %v713 = vunpack.c.l.b16 %v637
        %v714 = vunpack.c.l.b16 %v638
        %v715 = vunpack.c.l.b16 %v639
        %v716 = vunpack.c.l.b16 %v640
        %v717 = vunpack.c.l.b16 %v641
        %v718 = vunpack.c.l.b16 %v642
        %v719 = vunpack.c.l.b16 %v643
        %v720 = vunpack.c.l.b16 %v644
        %v721 = vunpack.c.l.b16 %v645
        %v722 = vunpack.c.l.b16 %v646
        %v723 = vunpack.c.l.b16 %v647
        %v724 = vunpack.c.l.b16 %v648
        %v725 = vunpack.c.l.b16 %v649
        %v726 = vunpack.c.l.b16 %v650
        %v727 = vunpack.c.l.b16 %v651
        %v728 = vunpack.c.l.b16 %v652
        %v729 = vunpack.c.l.b16 %v653
        %v730 = vunpack.c.l.b16 %v654
        %v731 = vunpack.c.l.b16 %v655
        %v732 = vunpack.c.l.b16 %v656
        %v733 = vunpack.c.l.b16 %v657
        %v734 = vunpack.c.l.b16 %v658
        %v735 = vunpack.c.l.b16 %v659
        %v736 = vunpack.c.l.b16 %v660
        %v737 = vpack.c.b16 %v706, %v705
        %v738 = vpack.c.b16 %v708, %v707
        %v739 = vpack.c.b16 %v710, %v709
        %v740 = vpack.c.b16 %v712, %v711
        %v741 = vpack.c.b16 %v714, %v713
        %v742 = vpack.c.b16 %v716, %v715
        %v743 = vpack.c.b16 %v718, %v717
        %v744 = vpack.c.b16 %v720, %v719
        %v745 = vpack.c.b16 %v722, %v721
        %v746 = vpack.c.b16 %v724, %v723
        %v747 = vpack.c.b16 %v726, %v725
        %v748 = vpack.c.b16 %v728, %v727
        %v749 = vpack.c.b16 %v730, %v729
        %v750 = vpack.c.b16 %v732, %v731
        %v751 = vpack.c.b16 %v734, %v733
        %v752 = vpack.c.b16 %v736, %v735
        %769 = vmatprep.subr.bf16.mxu0 0
        %770 = vmatpush1.bf16.xpose.msra.mxu0 %v737
        %771 = vmatprep.subr.bf16.mxu0 0
        %772 = vmatpush1.bf16.xpose.msra.mxu0 %v738
        %773 = vmatprep.subr.bf16.mxu0 0
        %774 = vmatpush1.bf16.xpose.msra.mxu0 %v739
        %775 = vmatprep.subr.bf16.mxu0 0
        %776 = vmatpush1.bf16.xpose.msra.mxu0 %v740
        %777 = vmatprep.subr.bf16.mxu0 0
        %778 = vmatpush1.bf16.xpose.msra.mxu0 %v741
        %779 = vmatprep.subr.bf16.mxu0 0
        %780 = vmatpush1.bf16.xpose.msra.mxu0 %v742
        %781 = vmatprep.subr.bf16.mxu0 0
        %782 = vmatpush1.bf16.xpose.msra.mxu0 %v743
        %783 = vmatprep.subr.bf16.mxu0 0
        %784 = vmatpush1.bf16.xpose.msra.mxu0 %v744
        %785 = vmatprep.subr.bf16.mxu0 0
        %786 = vmatpush1.bf16.xpose.msra.mxu0 %v745
        %787 = vmatprep.subr.bf16.mxu0 0
        %788 = vmatpush1.bf16.xpose.msra.mxu0 %v746
        %789 = vmatprep.subr.bf16.mxu0 0
        %790 = vmatpush1.bf16.xpose.msra.mxu0 %v747
        %791 = vmatprep.subr.bf16.mxu0 0
        %792 = vmatpush1.bf16.xpose.msra.mxu0 %v748
        %793 = vmatprep.subr.bf16.mxu0 0
        %794 = vmatpush1.bf16.xpose.msra.mxu0 %v749
        %795 = vmatprep.subr.bf16.mxu0 0
        %796 = vmatpush1.bf16.xpose.msra.mxu0 %v750
        %797 = vmatprep.subr.bf16.mxu0 0
        %798 = vmatpush1.bf16.xpose.msra.mxu0 %v751
        %799 = vmatprep.subr.bf16.mxu0 0
        %800 = vmatpush1.bf16.xpose.msra.mxu0 %v752
        %801 = vmatprep.mubr.bf16.mxu0 0
        %802 = vmatmul.mubr.bf16.gmra.mrb[0].mxu0 %v621
        %v803 = vpop.f32.mrb[0].mxu0
        %v804 = vadd.f32 %v666, %v803
        %v805 = vpop.f32.mrb[0].mxu0
        %v806 = vadd.f32 %v670, %v805
        %v807 = vpop.f32.mrb[0].mxu0
        %v808 = vadd.f32 %v666, %v807
        %v809 = vpop.f32.mrb[0].mxu0
        %v810 = vadd.f32 %v670, %v809
        %811 = vmatprep.mubr.bf16.mxu0 0
        %812 = vmatmul.mubr.bf16.gmra.mrb[0].mxu0 %v622
        %v813 = vpop.f32.mrb[0].mxu0
        %v814 = vadd.f32 %v666, %v813
        %v815 = vpop.f32.mrb[0].mxu0
        %v816 = vadd.f32 %v670, %v815
        %v817 = vpop.f32.mrb[0].mxu0
        %v818 = vadd.f32 %v666, %v817
        %v819 = vpop.f32.mrb[0].mxu0
        %v820 = vadd.f32 %v670, %v819
        %821 = vmatprep.mubr.bf16.mxu0 0
        %822 = vmatmul.mubr.bf16.gmra.mrb[0].mxu0 %v623
        %v823 = vpop.f32.mrb[0].mxu0
        %v824 = vadd.f32 %v666, %v823
        %v825 = vpop.f32.mrb[0].mxu0
        %v826 = vadd.f32 %v670, %v825
        %v827 = vpop.f32.mrb[0].mxu0
        %v828 = vadd.f32 %v666, %v827
        %v829 = vpop.f32.mrb[0].mxu0
        %v830 = vadd.f32 %v670, %v829
        %831 = vmatprep.mubr.bf16.mxu0 0
        %832 = vmatmul.mubr.bf16.gmra.mrb[0].mxu0 %v624
        %v833 = vpop.f32.mrb[0].mxu0
        %v834 = vadd.f32 %v666, %v833
        %v835 = vpop.f32.mrb[0].mxu0
        %v836 = vadd.f32 %v670, %v835
        %v837 = vpop.f32.mrb[0].mxu0
        %v838 = vadd.f32 %v666, %v837
        %v839 = vpop.f32.mrb[0].mxu0
        %v840 = vadd.f32 %v670, %v839
        %841 = vmatprep.mubr.bf16.mxu0 0
        %842 = vmatmul.mubr.bf16.gmra.mrb[0].mxu0 %v625
        %v843 = vpop.f32.mrb[0].mxu0
        %v844 = vadd.f32 %v666, %v843
        %v845 = vpop.f32.mrb[0].mxu0
        %v846 = vadd.f32 %v670, %v845
        %v847 = vpop.f32.mrb[0].mxu0
        %v848 = vadd.f32 %v666, %v847
        %v849 = vpop.f32.mrb[0].mxu0
        %v850 = vadd.f32 %v670, %v849
        %851 = vmatprep.mubr.bf16.mxu0 0
        %852 = vmatmul.mubr.bf16.gmra.mrb[0].mxu0 %v626
        %v853 = vpop.f32.mrb[0].mxu0
        %v854 = vadd.f32 %v666, %v853
        %v855 = vpop.f32.mrb[0].mxu0
        %v856 = vadd.f32 %v670, %v855
        %v857 = vpop.f32.mrb[0].mxu0
        %v858 = vadd.f32 %v666, %v857
        %v859 = vpop.f32.mrb[0].mxu0
        %v860 = vadd.f32 %v670, %v859
        %861 = vmatprep.mubr.bf16.mxu0 0
        %862 = vmatmul.mubr.bf16.gmra.mrb[0].mxu0 %v627
        %v863 = vpop.f32.mrb[0].mxu0
        %v864 = vadd.f32 %v666, %v863
        %v865 = vpop.f32.mrb[0].mxu0
        %v866 = vadd.f32 %v670, %v865
        %v867 = vpop.f32.mrb[0].mxu0
        %v868 = vadd.f32 %v666, %v867
        %v869 = vpop.f32.mrb[0].mxu0
        %v870 = vadd.f32 %v670, %v869
        %871 = vmatprep.mubr.bf16.mxu0 0
        %872 = vmatmul.mubr.bf16.gmra.mrb[0].mxu0 %v628
        %v873 = vpop.f32.mrb[0].mxu0
        %v874 = vadd.f32 %v666, %v873
        %v875 = vpop.f32.mrb[0].mxu0
        %v876 = vadd.f32 %v670, %v875
        %v877 = vpop.f32.mrb[0].mxu0
        %v878 = vadd.f32 %v666, %v877
        %v879 = vpop.f32.mrb[0].mxu0
        %v880 = vadd.f32 %v670, %v879
        %881 = vdwg.mxu0
        %v882 = vld [vmem:[%s431] sm:$0x3]
        %v883 = vld [vmem:[%s426] sm:$0xff]
        %v884 = vld [vmem:[%s426 + $0x8] sm:$0xff]
        %v885 = vld [vmem:[%s426 + $0x10] sm:$0xff]
        %v886 = vld [vmem:[%s426 + $0x18] sm:$0xff]
        %v887 = vld [vmem:[%s426 + $0x20] sm:$0xff]
        %v888 = vld [vmem:[%s426 + $0x28] sm:$0xff]
        %v889 = vld [vmem:[%s426 + $0x30] sm:$0xff]
        %v890 = vld [vmem:[%s426 + $0x38] sm:$0xff]
        %v891 = vld [vmem:[%s426 + $0x40] sm:$0xff]
        %v892 = vld [vmem:[%s426 + $0x48] sm:$0xff]
        %v893 = vld [vmem:[%s426 + $0x50] sm:$0xff]
        %v894 = vld [vmem:[%s426 + $0x58] sm:$0xff]
        %v895 = vld [vmem:[%s426 + $0x60] sm:$0xff]
        %v896 = vld [vmem:[%s426 + $0x68] sm:$0xff]
        %v897 = vld [vmem:[%s426 + $0x70] sm:$0xff]
        %v898 = vld [vmem:[%s426 + $0x78] sm:$0xff]
        %v899 = vlaneseq
        %v900 = vshrl.u32 %v899, 7
        %v901 = vsub.s32 0, %v900
        %v902 = vrot.slane %v882, %v901
        %v903 = vlaneseq
        %v904 = vshrl.u32 %v903, 7
        %v905 = vsub.s32 1, %v904
        %v906 = vrot.slane %v882, %v905
        %907 = vset.pattern.permute.xlu0 0
        %908 = vperm.xlu0 %907, %v883
        %v909 = vpop.permute.xlu0 %908
        %910 = vset.pattern.permute.xlu0 0
        %911 = vperm.xlu0 %910, %v884
        %v912 = vpop.permute.xlu0 %911
        %913 = vset.pattern.permute.xlu0 0
        %914 = vperm.xlu0 %913, %v885
        %v915 = vpop.permute.xlu0 %914
        %916 = vset.pattern.permute.xlu0 0
        %917 = vperm.xlu0 %916, %v886
        %v918 = vpop.permute.xlu0 %917
        %919 = vset.pattern.permute.xlu0 0
        %920 = vperm.xlu0 %919, %v887
        %v921 = vpop.permute.xlu0 %920
        %922 = vset.pattern.permute.xlu0 0
        %923 = vperm.xlu0 %922, %v888
        %v924 = vpop.permute.xlu0 %923
        %925 = vset.pattern.permute.xlu0 0
        %926 = vperm.xlu0 %925, %v889
        %v927 = vpop.permute.xlu0 %926
        %928 = vset.pattern.permute.xlu0 0
        %929 = vperm.xlu0 %928, %v890
        %v930 = vpop.permute.xlu0 %929
        %931 = vset.pattern.permute.xlu0 0
        %932 = vperm.xlu0 %931, %v891
        %v933 = vpop.permute.xlu0 %932
        %934 = vset.pattern.permute.xlu0 0
        %935 = vperm.xlu0 %934, %v892
        %v936 = vpop.permute.xlu0 %935
        %937 = vset.pattern.permute.xlu0 0
        %938 = vperm.xlu0 %937, %v893
        %v939 = vpop.permute.xlu0 %938
        %940 = vset.pattern.permute.xlu0 0
        %941 = vperm.xlu0 %940, %v894
        %v942 = vpop.permute.xlu0 %941
        %943 = vset.pattern.permute.xlu0 0
        %944 = vperm.xlu0 %943, %v895
        %v945 = vpop.permute.xlu0 %944
        %946 = vset.pattern.permute.xlu0 0
        %947 = vperm.xlu0 %946, %v896
        %v948 = vpop.permute.xlu0 %947
        %949 = vset.pattern.permute.xlu0 0
        %950 = vperm.xlu0 %949, %v897
        %v951 = vpop.permute.xlu0 %950
        %952 = vset.pattern.permute.xlu0 0
        %953 = vperm.xlu0 %952, %v898
        %v954 = vpop.permute.xlu0 %953
        %vm955 = vcmp.eq.s32.totalorder %v902, %v909
        %vm956 = vcmp.eq.s32.totalorder %v906, %v909
        %vm957 = vcmp.eq.s32.totalorder %v902, %v912
        %vm958 = vcmp.eq.s32.totalorder %v906, %v912
        %vm959 = vcmp.eq.s32.totalorder %v902, %v915
        %vm960 = vcmp.eq.s32.totalorder %v906, %v915
        %vm961 = vcmp.eq.s32.totalorder %v902, %v918
        %vm962 = vcmp.eq.s32.totalorder %v906, %v918
        %vm963 = vcmp.eq.s32.totalorder %v902, %v921
        %vm964 = vcmp.eq.s32.totalorder %v906, %v921
        %vm965 = vcmp.eq.s32.totalorder %v902, %v924
        %vm966 = vcmp.eq.s32.totalorder %v906, %v924
        %vm967 = vcmp.eq.s32.totalorder %v902, %v927
        %vm968 = vcmp.eq.s32.totalorder %v906, %v927
        %vm969 = vcmp.eq.s32.totalorder %v902, %v930
        %vm970 = vcmp.eq.s32.totalorder %v906, %v930
        %vm971 = vcmp.eq.s32.totalorder %v902, %v933
        %vm972 = vcmp.eq.s32.totalorder %v906, %v933
        %vm973 = vcmp.eq.s32.totalorder %v902, %v936
        %vm974 = vcmp.eq.s32.totalorder %v906, %v936
        %vm975 = vcmp.eq.s32.totalorder %v902, %v939
        %vm976 = vcmp.eq.s32.totalorder %v906, %v939
        %vm977 = vcmp.eq.s32.totalorder %v902, %v942
        %vm978 = vcmp.eq.s32.totalorder %v906, %v942
        %vm979 = vcmp.eq.s32.totalorder %v902, %v945
        %vm980 = vcmp.eq.s32.totalorder %v906, %v945
        %vm981 = vcmp.eq.s32.totalorder %v902, %v948
        %vm982 = vcmp.eq.s32.totalorder %v906, %v948
        %vm983 = vcmp.eq.s32.totalorder %v902, %v951
        %vm984 = vcmp.eq.s32.totalorder %v906, %v951
        %vm985 = vcmp.eq.s32.totalorder %v902, %v954
        %vm986 = vcmp.eq.s32.totalorder %v906, %v954
        %v987 = vsel %vm955, -10000.0, %v804
        %v988 = vsel %vm956, -10000.0, %v806
        %v989 = vsel %vm957, -10000.0, %v808
        %v990 = vsel %vm958, -10000.0, %v810
        %v991 = vsel %vm959, -10000.0, %v814
        %v992 = vsel %vm960, -10000.0, %v816
        %v993 = vsel %vm961, -10000.0, %v818
        %v994 = vsel %vm962, -10000.0, %v820
        %v995 = vsel %vm963, -10000.0, %v824
        %v996 = vsel %vm964, -10000.0, %v826
        %v997 = vsel %vm965, -10000.0, %v828
        %v998 = vsel %vm966, -10000.0, %v830
        %v999 = vsel %vm967, -10000.0, %v834
        %v1000 = vsel %vm968, -10000.0, %v836
        %v1001 = vsel %vm969, -10000.0, %v838
        %v1002 = vsel %vm970, -10000.0, %v840
        %v1003 = vsel %vm971, -10000.0, %v844
        %v1004 = vsel %vm972, -10000.0, %v846
        %v1005 = vsel %vm973, -10000.0, %v848
        %v1006 = vsel %vm974, -10000.0, %v850
        %v1007 = vsel %vm975, -10000.0, %v854
        %v1008 = vsel %vm976, -10000.0, %v856
        %v1009 = vsel %vm977, -10000.0, %v858
        %v1010 = vsel %vm978, -10000.0, %v860
        %v1011 = vsel %vm979, -10000.0, %v864
        %v1012 = vsel %vm980, -10000.0, %v866
        %v1013 = vsel %vm981, -10000.0, %v868
        %v1014 = vsel %vm982, -10000.0, %v870
        %v1015 = vsel %vm983, -10000.0, %v874
        %v1016 = vsel %vm984, -10000.0, %v876
        %v1017 = vsel %vm985, -10000.0, %v878
        %v1018 = vsel %vm986, -10000.0, %v880
        %v1019 = vld [vmem:[#allocation4] sm:$0xff]
        %v1020 = vld [vmem:[#allocation4 + $0x8] sm:$0xff]
        %v1021 = vld [vmem:[#allocation4 + $0x10] sm:$0xff]
        %v1022 = vld [vmem:[#allocation4 + $0x18] sm:$0xff]
        %v1023 = vld [vmem:[#allocation4 + $0x20] sm:$0xff]
        %v1024 = vld [vmem:[#allocation4 + $0x28] sm:$0xff]
        %v1025 = vld [vmem:[#allocation4 + $0x30] sm:$0xff]
        %v1026 = vld [vmem:[#allocation4 + $0x38] sm:$0xff]
        %v1027 = vld [vmem:[#allocation4 + $0x40] sm:$0xff]
        %v1028 = vld [vmem:[#allocation4 + $0x48] sm:$0xff]
        %v1029 = vld [vmem:[#allocation4 + $0x50] sm:$0xff]
        %v1030 = vld [vmem:[#allocation4 + $0x58] sm:$0xff]
        %v1031 = vld [vmem:[#allocation4 + $0x60] sm:$0xff]
        %v1032 = vld [vmem:[#allocation4 + $0x68] sm:$0xff]
        %v1033 = vld [vmem:[#allocation4 + $0x70] sm:$0xff]
        %v1034 = vld [vmem:[#allocation4 + $0x78] sm:$0xff]
        %v1035 = vmax.f32 %v987, %v988
        %1036 = vmax.xlane.f32.xlu0 %v1035
        %v1037 = vpop.xlane.xlu0 %1036
        %v1038 = vmax.f32 %v989, %v990
        %1039 = vmax.xlane.f32.xlu0 %v1038
        %v1040 = vpop.xlane.xlu0 %1039
        %v1041 = vmax.f32 %v991, %v992
        %1042 = vmax.xlane.f32.xlu0 %v1041
        %v1043 = vpop.xlane.xlu0 %1042
        %v1044 = vmax.f32 %v993, %v994
        %1045 = vmax.xlane.f32.xlu0 %v1044
        %v1046 = vpop.xlane.xlu0 %1045
        %v1047 = vmax.f32 %v995, %v996
        %1048 = vmax.xlane.f32.xlu0 %v1047
        %v1049 = vpop.xlane.xlu0 %1048
        %v1050 = vmax.f32 %v997, %v998
        %1051 = vmax.xlane.f32.xlu0 %v1050
        %v1052 = vpop.xlane.xlu0 %1051
        %v1053 = vmax.f32 %v999, %v1000
        %1054 = vmax.xlane.f32.xlu0 %v1053
        %v1055 = vpop.xlane.xlu0 %1054
        %v1056 = vmax.f32 %v1001, %v1002
        %1057 = vmax.xlane.f32.xlu0 %v1056
        %v1058 = vpop.xlane.xlu0 %1057
        %v1059 = vmax.f32 %v1003, %v1004
        %1060 = vmax.xlane.f32.xlu0 %v1059
        %v1061 = vpop.xlane.xlu0 %1060
        %v1062 = vmax.f32 %v1005, %v1006
        %1063 = vmax.xlane.f32.xlu0 %v1062
        %v1064 = vpop.xlane.xlu0 %1063
        %v1065 = vmax.f32 %v1007, %v1008
        %1066 = vmax.xlane.f32.xlu0 %v1065
        %v1067 = vpop.xlane.xlu0 %1066
        %v1068 = vmax.f32 %v1009, %v1010
        %1069 = vmax.xlane.f32.xlu0 %v1068
        %v1070 = vpop.xlane.xlu0 %1069
        %v1071 = vmax.f32 %v1011, %v1012
        %1072 = vmax.xlane.f32.xlu0 %v1071
        %v1073 = vpop.xlane.xlu0 %1072
        %v1074 = vmax.f32 %v1013, %v1014
        %1075 = vmax.xlane.f32.xlu0 %v1074
        %v1076 = vpop.xlane.xlu0 %1075
        %v1077 = vmax.f32 %v1015, %v1016
        %1078 = vmax.xlane.f32.xlu0 %v1077
        %v1079 = vpop.xlane.xlu0 %1078
        %v1080 = vmax.f32 %v1017, %v1018
        %1081 = vmax.xlane.f32.xlu0 %v1080
        %v1082 = vpop.xlane.xlu0 %1081
        %v1083 = vmax.f32 %v1019, %v1037
        %v1084 = vmax.f32 %v1020, %v1040
        %v1085 = vmax.f32 %v1021, %v1043
        %v1086 = vmax.f32 %v1022, %v1046
        %v1087 = vmax.f32 %v1023, %v1049
        %v1088 = vmax.f32 %v1024, %v1052
        %v1089 = vmax.f32 %v1025, %v1055
        %v1090 = vmax.f32 %v1026, %v1058
        %v1091 = vmax.f32 %v1027, %v1061
        %v1092 = vmax.f32 %v1028, %v1064
        %v1093 = vmax.f32 %v1029, %v1067
        %v1094 = vmax.f32 %v1030, %v1070
        %v1095 = vmax.f32 %v1031, %v1073
        %v1096 = vmax.f32 %v1032, %v1076
        %v1097 = vmax.f32 %v1033, %v1079
        %v1098 = vmax.f32 %v1034, %v1082
        %v1099 = vld [vmem:[#allocation5] sm:$0xff]
        %v1100 = vld [vmem:[#allocation5 + $0x8] sm:$0xff]
        %v1101 = vld [vmem:[#allocation5 + $0x10] sm:$0xff]
        %v1102 = vld [vmem:[#allocation5 + $0x18] sm:$0xff]
        %v1103 = vld [vmem:[#allocation5 + $0x20] sm:$0xff]
        %v1104 = vld [vmem:[#allocation5 + $0x28] sm:$0xff]
        %v1105 = vld [vmem:[#allocation5 + $0x30] sm:$0xff]
        %v1106 = vld [vmem:[#allocation5 + $0x38] sm:$0xff]
        %v1107 = vld [vmem:[#allocation5 + $0x40] sm:$0xff]
        %v1108 = vld [vmem:[#allocation5 + $0x48] sm:$0xff]
        %v1109 = vld [vmem:[#allocation5 + $0x50] sm:$0xff]
        %v1110 = vld [vmem:[#allocation5 + $0x58] sm:$0xff]
        %v1111 = vld [vmem:[#allocation5 + $0x60] sm:$0xff]
        %v1112 = vld [vmem:[#allocation5 + $0x68] sm:$0xff]
        %v1113 = vld [vmem:[#allocation5 + $0x70] sm:$0xff]
        %v1114 = vld [vmem:[#allocation5 + $0x78] sm:$0xff]
        %v1115 = vsub.f32 %v1019, %v1083
        %v1116 = vsub.f32 %v1020, %v1084
        %v1117 = vsub.f32 %v1021, %v1085
        %v1118 = vsub.f32 %v1022, %v1086
        %v1119 = vsub.f32 %v1023, %v1087
        %v1120 = vsub.f32 %v1024, %v1088
        %v1121 = vsub.f32 %v1025, %v1089
        %v1122 = vsub.f32 %v1026, %v1090
        %v1123 = vsub.f32 %v1027, %v1091
        %v1124 = vsub.f32 %v1028, %v1092
        %v1125 = vsub.f32 %v1029, %v1093
        %v1126 = vsub.f32 %v1030, %v1094
        %v1127 = vsub.f32 %v1031, %v1095
        %v1128 = vsub.f32 %v1032, %v1096
        %v1129 = vsub.f32 %v1033, %v1097
        %v1130 = vsub.f32 %v1034, %v1098
        %v1131 = vmul.f32 %v1115, 1.442695
        %v1132 = vpow.pop %v1131
        %v1133 = vmul.f32 %v1116, 1.442695
        %v1134 = vpow.pop %v1133
        %v1135 = vmul.f32 %v1117, 1.442695
        %v1136 = vpow.pop %v1135
        %v1137 = vmul.f32 %v1118, 1.442695
        %v1138 = vpow.pop %v1137
        %v1139 = vmul.f32 %v1119, 1.442695
        %v1140 = vpow.pop %v1139
        %v1141 = vmul.f32 %v1120, 1.442695
        %v1142 = vpow.pop %v1141
        %v1143 = vmul.f32 %v1121, 1.442695
        %v1144 = vpow.pop %v1143
        %v1145 = vmul.f32 %v1122, 1.442695
        %v1146 = vpow.pop %v1145
        %v1147 = vmul.f32 %v1123, 1.442695
        %v1148 = vpow.pop %v1147
        %v1149 = vmul.f32 %v1124, 1.442695
        %v1150 = vpow.pop %v1149
        %v1151 = vmul.f32 %v1125, 1.442695
        %v1152 = vpow.pop %v1151
        %v1153 = vmul.f32 %v1126, 1.442695
        %v1154 = vpow.pop %v1153
        %v1155 = vmul.f32 %v1127, 1.442695
        %v1156 = vpow.pop %v1155
        %v1157 = vmul.f32 %v1128, 1.442695
        %v1158 = vpow.pop %v1157
        %v1159 = vmul.f32 %v1129, 1.442695
        %v1160 = vpow.pop %v1159
        %v1161 = vmul.f32 %v1130, 1.442695
        %v1162 = vpow.pop %v1161
        %v1163 = vmul.f32 %v1099, %v1132
        %v1164 = vmul.f32 %v1100, %v1134
        %v1165 = vmul.f32 %v1101, %v1136
        %v1166 = vmul.f32 %v1102, %v1138
        %v1167 = vmul.f32 %v1103, %v1140
        %v1168 = vmul.f32 %v1104, %v1142
        %v1169 = vmul.f32 %v1105, %v1144
        %v1170 = vmul.f32 %v1106, %v1146
        %v1171 = vmul.f32 %v1107, %v1148
        %v1172 = vmul.f32 %v1108, %v1150
        %v1173 = vmul.f32 %v1109, %v1152
        %v1174 = vmul.f32 %v1110, %v1154
        %v1175 = vmul.f32 %v1111, %v1156
        %v1176 = vmul.f32 %v1112, %v1158
        %v1177 = vmul.f32 %v1113, %v1160
        %v1178 = vmul.f32 %v1114, %v1162
        %1180 = vset.pattern.permute.xlu0 0
        %1181 = vperm.xlu0 %1180, %v1083
        %v1182 = vpop.permute.xlu0 %1181
        %1185 = vset.pattern.permute.xlu0 0
        %1186 = vperm.xlu0 %1185, %v1084
        %v1187 = vpop.permute.xlu0 %1186
        %1190 = vset.pattern.permute.xlu0 0
        %1191 = vperm.xlu0 %1190, %v1085
        %v1192 = vpop.permute.xlu0 %1191
        %1195 = vset.pattern.permute.xlu0 0
        %1196 = vperm.xlu0 %1195, %v1086
        %v1197 = vpop.permute.xlu0 %1196
        %1200 = vset.pattern.permute.xlu0 0
        %1201 = vperm.xlu0 %1200, %v1087
        %v1202 = vpop.permute.xlu0 %1201
        %1205 = vset.pattern.permute.xlu0 0
        %1206 = vperm.xlu0 %1205, %v1088
        %v1207 = vpop.permute.xlu0 %1206
        %1210 = vset.pattern.permute.xlu0 0
        %1211 = vperm.xlu0 %1210, %v1089
        %v1212 = vpop.permute.xlu0 %1211
        %1215 = vset.pattern.permute.xlu0 0
        %1216 = vperm.xlu0 %1215, %v1090
        %v1217 = vpop.permute.xlu0 %1216
        %1220 = vset.pattern.permute.xlu0 0
        %1221 = vperm.xlu0 %1220, %v1091
        %v1222 = vpop.permute.xlu0 %1221
        %1225 = vset.pattern.permute.xlu0 0
        %1226 = vperm.xlu0 %1225, %v1092
        %v1227 = vpop.permute.xlu0 %1226
        %1230 = vset.pattern.permute.xlu0 0
        %1231 = vperm.xlu0 %1230, %v1093
        %v1232 = vpop.permute.xlu0 %1231
        %1235 = vset.pattern.permute.xlu0 0
        %1236 = vperm.xlu0 %1235, %v1094
        %v1237 = vpop.permute.xlu0 %1236
        %1240 = vset.pattern.permute.xlu0 0
        %1241 = vperm.xlu0 %1240, %v1095
        %v1242 = vpop.permute.xlu0 %1241
        %1245 = vset.pattern.permute.xlu0 0
        %1246 = vperm.xlu0 %1245, %v1096
        %v1247 = vpop.permute.xlu0 %1246
        %1250 = vset.pattern.permute.xlu0 0
        %1251 = vperm.xlu0 %1250, %v1097
        %v1252 = vpop.permute.xlu0 %1251
        %1255 = vset.pattern.permute.xlu0 0
        %1256 = vperm.xlu0 %1255, %v1098
        %v1257 = vpop.permute.xlu0 %1256
        %v1259 = vsub.f32 %v987, %v1182
        %v1260 = vsub.f32 %v988, %v1182
        %v1261 = vsub.f32 %v989, %v1187
        %v1262 = vsub.f32 %v990, %v1187
        %v1263 = vsub.f32 %v991, %v1192
        %v1264 = vsub.f32 %v992, %v1192
        %v1265 = vsub.f32 %v993, %v1197
        %v1266 = vsub.f32 %v994, %v1197
        %v1267 = vsub.f32 %v995, %v1202
        %v1268 = vsub.f32 %v996, %v1202
        %v1269 = vsub.f32 %v997, %v1207
        %v1270 = vsub.f32 %v998, %v1207
        %v1271 = vsub.f32 %v999, %v1212
        %v1272 = vsub.f32 %v1000, %v1212
        %v1273 = vsub.f32 %v1001, %v1217
        %v1274 = vsub.f32 %v1002, %v1217
        %v1275 = vsub.f32 %v1003, %v1222
        %v1276 = vsub.f32 %v1004, %v1222
        %v1277 = vsub.f32 %v1005, %v1227
        %v1278 = vsub.f32 %v1006, %v1227
        %v1279 = vsub.f32 %v1007, %v1232
        %v1280 = vsub.f32 %v1008, %v1232
        %v1281 = vsub.f32 %v1009, %v1237
        %v1282 = vsub.f32 %v1010, %v1237
        %v1283 = vsub.f32 %v1011, %v1242
        %v1284 = vsub.f32 %v1012, %v1242
        %v1285 = vsub.f32 %v1013, %v1247
        %v1286 = vsub.f32 %v1014, %v1247
        %v1287 = vsub.f32 %v1015, %v1252
        %v1288 = vsub.f32 %v1016, %v1252
        %v1289 = vsub.f32 %v1017, %v1257
        %v1290 = vsub.f32 %v1018, %v1257
        %v1291 = vmul.f32 %v1259, 1.442695
        %v1292 = vpow.pop %v1291
        %v1293 = vmul.f32 %v1260, 1.442695
        %v1294 = vpow.pop %v1293
        %v1295 = vmul.f32 %v1261, 1.442695
        %v1296 = vpow.pop %v1295
        %v1297 = vmul.f32 %v1262, 1.442695
        %v1298 = vpow.pop %v1297
        %v1299 = vmul.f32 %v1263, 1.442695
        %v1300 = vpow.pop %v1299
        %v1301 = vmul.f32 %v1264, 1.442695
        %v1302 = vpow.pop %v1301
        %v1303 = vmul.f32 %v1265, 1.442695
        %v1304 = vpow.pop %v1303
        %v1305 = vmul.f32 %v1266, 1.442695
        %v1306 = vpow.pop %v1305
        %v1307 = vmul.f32 %v1267, 1.442695
        %v1308 = vpow.pop %v1307
        %v1309 = vmul.f32 %v1268, 1.442695
        %v1310 = vpow.pop %v1309
        %v1311 = vmul.f32 %v1269, 1.442695
        %v1312 = vpow.pop %v1311
        %v1313 = vmul.f32 %v1270, 1.442695
        %v1314 = vpow.pop %v1313
        %v1315 = vmul.f32 %v1271, 1.442695
        %v1316 = vpow.pop %v1315
        %v1317 = vmul.f32 %v1272, 1.442695
        %v1318 = vpow.pop %v1317
        %v1319 = vmul.f32 %v1273, 1.442695
        %v1320 = vpow.pop %v1319
        %v1321 = vmul.f32 %v1274, 1.442695
        %v1322 = vpow.pop %v1321
        %v1323 = vmul.f32 %v1275, 1.442695
        %v1324 = vpow.pop %v1323
        %v1325 = vmul.f32 %v1276, 1.442695
        %v1326 = vpow.pop %v1325
        %v1327 = vmul.f32 %v1277, 1.442695
        %v1328 = vpow.pop %v1327
        %v1329 = vmul.f32 %v1278, 1.442695
        %v1330 = vpow.pop %v1329
        %v1331 = vmul.f32 %v1279, 1.442695
        %v1332 = vpow.pop %v1331
        %v1333 = vmul.f32 %v1280, 1.442695
        %v1334 = vpow.pop %v1333
        %v1335 = vmul.f32 %v1281, 1.442695
        %v1336 = vpow.pop %v1335
        %v1337 = vmul.f32 %v1282, 1.442695
        %v1338 = vpow.pop %v1337
        %v1339 = vmul.f32 %v1283, 1.442695
        %v1340 = vpow.pop %v1339
        %v1341 = vmul.f32 %v1284, 1.442695
        %v1342 = vpow.pop %v1341
        %v1343 = vmul.f32 %v1285, 1.442695
        %v1344 = vpow.pop %v1343
        %v1345 = vmul.f32 %v1286, 1.442695
        %v1346 = vpow.pop %v1345
        %v1347 = vmul.f32 %v1287, 1.442695
        %v1348 = vpow.pop %v1347
        %v1349 = vmul.f32 %v1288, 1.442695
        %v1350 = vpow.pop %v1349
        %v1351 = vmul.f32 %v1289, 1.442695
        %v1352 = vpow.pop %v1351
        %v1353 = vmul.f32 %v1290, 1.442695
        %v1354 = vpow.pop %v1353
        %v1355 = vadd.f32 %v1292, %v1294
        %1356 = vadd.xlane.f32.xlu0 %v1355
        %v1357 = vpop.xlane.xlu0 %1356
        %v1358 = vadd.f32 %v1296, %v1298
        %1359 = vadd.xlane.f32.xlu0 %v1358
        %v1360 = vpop.xlane.xlu0 %1359
        %v1361 = vadd.f32 %v1300, %v1302
        %1362 = vadd.xlane.f32.xlu0 %v1361
        %v1363 = vpop.xlane.xlu0 %1362
        %v1364 = vadd.f32 %v1304, %v1306
        %1365 = vadd.xlane.f32.xlu0 %v1364
        %v1366 = vpop.xlane.xlu0 %1365
        %v1367 = vadd.f32 %v1308, %v1310
        %1368 = vadd.xlane.f32.xlu0 %v1367
        %v1369 = vpop.xlane.xlu0 %1368
        %v1370 = vadd.f32 %v1312, %v1314
        %1371 = vadd.xlane.f32.xlu0 %v1370
        %v1372 = vpop.xlane.xlu0 %1371
        %v1373 = vadd.f32 %v1316, %v1318
        %1374 = vadd.xlane.f32.xlu0 %v1373
        %v1375 = vpop.xlane.xlu0 %1374
        %v1376 = vadd.f32 %v1320, %v1322
        %1377 = vadd.xlane.f32.xlu0 %v1376
        %v1378 = vpop.xlane.xlu0 %1377
        %v1379 = vadd.f32 %v1324, %v1326
        %1380 = vadd.xlane.f32.xlu0 %v1379
        %v1381 = vpop.xlane.xlu0 %1380
        %v1382 = vadd.f32 %v1328, %v1330
        %1383 = vadd.xlane.f32.xlu0 %v1382
        %v1384 = vpop.xlane.xlu0 %1383
        %v1385 = vadd.f32 %v1332, %v1334
        %1386 = vadd.xlane.f32.xlu0 %v1385
        %v1387 = vpop.xlane.xlu0 %1386
        %v1388 = vadd.f32 %v1336, %v1338
        %1389 = vadd.xlane.f32.xlu0 %v1388
        %v1390 = vpop.xlane.xlu0 %1389
        %v1391 = vadd.f32 %v1340, %v1342
        %1392 = vadd.xlane.f32.xlu0 %v1391
        %v1393 = vpop.xlane.xlu0 %1392
        %v1394 = vadd.f32 %v1344, %v1346
        %1395 = vadd.xlane.f32.xlu0 %v1394
        %v1396 = vpop.xlane.xlu0 %1395
        %v1397 = vadd.f32 %v1348, %v1350
        %1398 = vadd.xlane.f32.xlu0 %v1397
        %v1399 = vpop.xlane.xlu0 %1398
        %v1400 = vadd.f32 %v1352, %v1354
        %1401 = vadd.xlane.f32.xlu0 %v1400
        %v1402 = vpop.xlane.xlu0 %1401
        %v1403 = vadd.f32 %v1163, %v1357
        %v1404 = vadd.f32 %v1164, %v1360
        %v1405 = vadd.f32 %v1165, %v1363
        %v1406 = vadd.f32 %v1166, %v1366
        %v1407 = vadd.f32 %v1167, %v1369
        %v1408 = vadd.f32 %v1168, %v1372
        %v1409 = vadd.f32 %v1169, %v1375
        %v1410 = vadd.f32 %v1170, %v1378
        %v1411 = vadd.f32 %v1171, %v1381
        %v1412 = vadd.f32 %v1172, %v1384
        %v1413 = vadd.f32 %v1173, %v1387
        %v1414 = vadd.f32 %v1174, %v1390
        %v1415 = vadd.f32 %v1175, %v1393
        %v1416 = vadd.f32 %v1176, %v1396
        %v1417 = vadd.f32 %v1177, %v1399
        %v1418 = vadd.f32 %v1178, %v1402
        %vm1419 = vcmask 7168
        %1420 = vst.msk [vmem:[#allocation5] sm:$0xff] %vm1419, %v1403
        %1421 = vst.msk [vmem:[#allocation5 + $0x8] sm:$0xff] %vm1419, %v1404
        %1422 = vst.msk [vmem:[#allocation5 + $0x10] sm:$0xff] %vm1419, %v1405
        %1423 = vst.msk [vmem:[#allocation5 + $0x18] sm:$0xff] %vm1419, %v1406
        %1424 = vst.msk [vmem:[#allocation5 + $0x20] sm:$0xff] %vm1419, %v1407
        %1425 = vst.msk [vmem:[#allocation5 + $0x28] sm:$0xff] %vm1419, %v1408
        %1426 = vst.msk [vmem:[#allocation5 + $0x30] sm:$0xff] %vm1419, %v1409
        %1427 = vst.msk [vmem:[#allocation5 + $0x38] sm:$0xff] %vm1419, %v1410
        %1428 = vst.msk [vmem:[#allocation5 + $0x40] sm:$0xff] %vm1419, %v1411
        %1429 = vst.msk [vmem:[#allocation5 + $0x48] sm:$0xff] %vm1419, %v1412
        %1430 = vst.msk [vmem:[#allocation5 + $0x50] sm:$0xff] %vm1419, %v1413
        %1431 = vst.msk [vmem:[#allocation5 + $0x58] sm:$0xff] %vm1419, %v1414
        %1432 = vst.msk [vmem:[#allocation5 + $0x60] sm:$0xff] %vm1419, %v1415
        %1433 = vst.msk [vmem:[#allocation5 + $0x68] sm:$0xff] %vm1419, %v1416
        %1434 = vst.msk [vmem:[#allocation5 + $0x70] sm:$0xff] %vm1419, %v1417
        %1435 = vst.msk [vmem:[#allocation5 + $0x78] sm:$0xff] %vm1419, %v1418
        %1436 = vst.msk [vmem:[#allocation4] sm:$0xff] %vm1419, %v1083
        %1437 = vst.msk [vmem:[#allocation4 + $0x8] sm:$0xff] %vm1419, %v1084
        %1438 = vst.msk [vmem:[#allocation4 + $0x10] sm:$0xff] %vm1419, %v1085
        %1439 = vst.msk [vmem:[#allocation4 + $0x18] sm:$0xff] %vm1419, %v1086
        %1440 = vst.msk [vmem:[#allocation4 + $0x20] sm:$0xff] %vm1419, %v1087
        %1441 = vst.msk [vmem:[#allocation4 + $0x28] sm:$0xff] %vm1419, %v1088
        %1442 = vst.msk [vmem:[#allocation4 + $0x30] sm:$0xff] %vm1419, %v1089
        %1443 = vst.msk [vmem:[#allocation4 + $0x38] sm:$0xff] %vm1419, %v1090
        %1444 = vst.msk [vmem:[#allocation4 + $0x40] sm:$0xff] %vm1419, %v1091
        %1445 = vst.msk [vmem:[#allocation4 + $0x48] sm:$0xff] %vm1419, %v1092
        %1446 = vst.msk [vmem:[#allocation4 + $0x50] sm:$0xff] %vm1419, %v1093
        %1447 = vst.msk [vmem:[#allocation4 + $0x58] sm:$0xff] %vm1419, %v1094
        %1448 = vst.msk [vmem:[#allocation4 + $0x60] sm:$0xff] %vm1419, %v1095
        %1449 = vst.msk [vmem:[#allocation4 + $0x68] sm:$0xff] %vm1419, %v1096
        %1450 = vst.msk [vmem:[#allocation4 + $0x70] sm:$0xff] %vm1419, %v1097
        %1451 = vst.msk [vmem:[#allocation4 + $0x78] sm:$0xff] %vm1419, %v1098
        %p1452 = scmp.eq.s32.totalorder %s26, 1
        // Predicated region
        $region57: #{tpu_custom_call.1} parent=47 // pred_check
          %p1453 = pneg %p1452
        $region58: #{tpu_custom_call.1} parent=47 // pred_check_branch
          %1455 = sbr.rel (%p1453) target = $region60
        $region59: #{tpu_custom_call.1} parent=47 // pred_region
          %v1456 = vld [vmem:[#allocation4] sm:$0xff]
          %v1457 = vld [vmem:[#allocation4 + $0x8] sm:$0xff]
          %v1458 = vld [vmem:[#allocation4 + $0x10] sm:$0xff]
          %v1459 = vld [vmem:[#allocation4 + $0x18] sm:$0xff]
          %v1460 = vld [vmem:[#allocation4 + $0x20] sm:$0xff]
          %v1461 = vld [vmem:[#allocation4 + $0x28] sm:$0xff]
          %v1462 = vld [vmem:[#allocation4 + $0x30] sm:$0xff]
          %v1463 = vld [vmem:[#allocation4 + $0x38] sm:$0xff]
          %v1464 = vld [vmem:[#allocation4 + $0x40] sm:$0xff]
          %v1465 = vld [vmem:[#allocation4 + $0x48] sm:$0xff]
          %v1466 = vld [vmem:[#allocation4 + $0x50] sm:$0xff]
          %v1467 = vld [vmem:[#allocation4 + $0x58] sm:$0xff]
          %v1468 = vld [vmem:[#allocation4 + $0x60] sm:$0xff]
          %v1469 = vld [vmem:[#allocation4 + $0x68] sm:$0xff]
          %v1470 = vld [vmem:[#allocation4 + $0x70] sm:$0xff]
          %v1471 = vld [vmem:[#allocation4 + $0x78] sm:$0xff]
          %v1472 = vld [vmem:[#allocation5] sm:$0xff]
          %v1473 = vld [vmem:[#allocation5 + $0x8] sm:$0xff]
          %v1474 = vld [vmem:[#allocation5 + $0x10] sm:$0xff]
          %v1475 = vld [vmem:[#allocation5 + $0x18] sm:$0xff]
          %v1476 = vld [vmem:[#allocation5 + $0x20] sm:$0xff]
          %v1477 = vld [vmem:[#allocation5 + $0x28] sm:$0xff]
          %v1478 = vld [vmem:[#allocation5 + $0x30] sm:$0xff]
          %v1479 = vld [vmem:[#allocation5 + $0x38] sm:$0xff]
          %v1480 = vld [vmem:[#allocation5 + $0x40] sm:$0xff]
          %v1481 = vld [vmem:[#allocation5 + $0x48] sm:$0xff]
          %v1482 = vld [vmem:[#allocation5 + $0x50] sm:$0xff]
          %v1483 = vld [vmem:[#allocation5 + $0x58] sm:$0xff]
          %v1484 = vld [vmem:[#allocation5 + $0x60] sm:$0xff]
          %v1485 = vld [vmem:[#allocation5 + $0x68] sm:$0xff]
          %v1486 = vld [vmem:[#allocation5 + $0x70] sm:$0xff]
          %v1487 = vld [vmem:[#allocation5 + $0x78] sm:$0xff]
          %v1488 = vlog2.pop %v1472
          %v1489 = vmul.f32 %v1488, 0.6931472
          %v1490 = vlog2.pop %v1473
          %v1491 = vmul.f32 %v1490, 0.6931472
          %v1492 = vlog2.pop %v1474
          %v1493 = vmul.f32 %v1492, 0.6931472
          %v1494 = vlog2.pop %v1475
          %v1495 = vmul.f32 %v1494, 0.6931472
          %v1496 = vlog2.pop %v1476
          %v1497 = vmul.f32 %v1496, 0.6931472
          %v1498 = vlog2.pop %v1477
          %v1499 = vmul.f32 %v1498, 0.6931472
          %v1500 = vlog2.pop %v1478
          %v1501 = vmul.f32 %v1500, 0.6931472
          %v1502 = vlog2.pop %v1479
          %v1503 = vmul.f32 %v1502, 0.6931472
          %v1504 = vlog2.pop %v1480
          %v1505 = vmul.f32 %v1504, 0.6931472
          %v1506 = vlog2.pop %v1481
          %v1507 = vmul.f32 %v1506, 0.6931472
          %v1508 = vlog2.pop %v1482
          %v1509 = vmul.f32 %v1508, 0.6931472
          %v1510 = vlog2.pop %v1483
          %v1511 = vmul.f32 %v1510, 0.6931472
          %v1512 = vlog2.pop %v1484
          %v1513 = vmul.f32 %v1512, 0.6931472
          %v1514 = vlog2.pop %v1485
          %v1515 = vmul.f32 %v1514, 0.6931472
          %v1516 = vlog2.pop %v1486
          %v1517 = vmul.f32 %v1516, 0.6931472
          %v1518 = vlog2.pop %v1487
          %v1519 = vmul.f32 %v1518, 0.6931472
          %v1520 = vadd.f32 %v1456, %v1489
          %v1521 = vadd.f32 %v1457, %v1491
          %v1522 = vadd.f32 %v1458, %v1493
          %v1523 = vadd.f32 %v1459, %v1495
          %v1524 = vadd.f32 %v1460, %v1497
          %v1525 = vadd.f32 %v1461, %v1499
          %v1526 = vadd.f32 %v1462, %v1501
          %v1527 = vadd.f32 %v1463, %v1503
          %v1528 = vadd.f32 %v1464, %v1505
          %v1529 = vadd.f32 %v1465, %v1507
          %v1530 = vadd.f32 %v1466, %v1509
          %v1531 = vadd.f32 %v1467, %v1511
          %v1532 = vadd.f32 %v1468, %v1513
          %v1533 = vadd.f32 %v1469, %v1515
          %v1534 = vadd.f32 %v1470, %v1517
          %v1535 = vadd.f32 %v1471, %v1519
          %v1536 = vld [vmem:[#allocation3] sm:$0xff]
          %v1537 = vld [vmem:[#allocation3 + $0x8] sm:$0xff]
          %v1538 = vld [vmem:[#allocation3 + $0x10] sm:$0xff]
          %v1539 = vld [vmem:[#allocation3 + $0x18] sm:$0xff]
          %v1540 = vld [vmem:[#allocation3 + $0x20] sm:$0xff]
          %v1541 = vld [vmem:[#allocation3 + $0x28] sm:$0xff]
          %v1542 = vld [vmem:[#allocation3 + $0x30] sm:$0xff]
          %v1543 = vld [vmem:[#allocation3 + $0x38] sm:$0xff]
          %v1544 = vld [vmem:[#allocation3 + $0x40] sm:$0xff]
          %v1545 = vld [vmem:[#allocation3 + $0x48] sm:$0xff]
          %v1546 = vld [vmem:[#allocation3 + $0x50] sm:$0xff]
          %v1547 = vld [vmem:[#allocation3 + $0x58] sm:$0xff]
          %v1548 = vld [vmem:[#allocation3 + $0x60] sm:$0xff]
          %v1549 = vld [vmem:[#allocation3 + $0x68] sm:$0xff]
          %v1550 = vld [vmem:[#allocation3 + $0x70] sm:$0xff]
          %v1551 = vld [vmem:[#allocation3 + $0x78] sm:$0xff]
          %v1552 = vsub.f32 %v1520, %v1536
          %v1553 = vsub.f32 %v1521, %v1537
          %v1554 = vsub.f32 %v1522, %v1538
          %v1555 = vsub.f32 %v1523, %v1539
          %v1556 = vsub.f32 %v1524, %v1540
          %v1557 = vsub.f32 %v1525, %v1541
          %v1558 = vsub.f32 %v1526, %v1542
          %v1559 = vsub.f32 %v1527, %v1543
          %v1560 = vsub.f32 %v1528, %v1544
          %v1561 = vsub.f32 %v1529, %v1545
          %v1562 = vsub.f32 %v1530, %v1546
          %v1563 = vsub.f32 %v1531, %v1547
          %v1564 = vsub.f32 %v1532, %v1548
          %v1565 = vsub.f32 %v1533, %v1549
          %v1566 = vsub.f32 %v1534, %v1550
          %v1567 = vsub.f32 %v1535, %v1551
          %1568 = vst.msk [vmem:[%s437] sm:$0xff] %vm1419, %v1552
          %1569 = vst.msk [vmem:[%s437 + $0x8] sm:$0xff] %vm1419, %v1553
          %1570 = vst.msk [vmem:[%s437 + $0x10] sm:$0xff] %vm1419, %v1554
          %1571 = vst.msk [vmem:[%s437 + $0x18] sm:$0xff] %vm1419, %v1555
          %1572 = vst.msk [vmem:[%s437 + $0x20] sm:$0xff] %vm1419, %v1556
          %1573 = vst.msk [vmem:[%s437 + $0x28] sm:$0xff] %vm1419, %v1557
          %1574 = vst.msk [vmem:[%s437 + $0x30] sm:$0xff] %vm1419, %v1558
          %1575 = vst.msk [vmem:[%s437 + $0x38] sm:$0xff] %vm1419, %v1559
          %1576 = vst.msk [vmem:[%s437 + $0x40] sm:$0xff] %vm1419, %v1560
          %1577 = vst.msk [vmem:[%s437 + $0x48] sm:$0xff] %vm1419, %v1561
          %1578 = vst.msk [vmem:[%s437 + $0x50] sm:$0xff] %vm1419, %v1562
          %1579 = vst.msk [vmem:[%s437 + $0x58] sm:$0xff] %vm1419, %v1563
          %1580 = vst.msk [vmem:[%s437 + $0x60] sm:$0xff] %vm1419, %v1564
          %1581 = vst.msk [vmem:[%s437 + $0x68] sm:$0xff] %vm1419, %v1565
          %1582 = vst.msk [vmem:[%s437 + $0x70] sm:$0xff] %vm1419, %v1566
          %1583 = vst.msk [vmem:[%s437 + $0x78] sm:$0xff] %vm1419, %v1567
        $region60: #{tpu_custom_call.1} parent=47 // pred_fallthru
          _
        %s1584 = smul.u32 16, %s25
        %p1585 = scmp.lt.s32.totalorder %s1584, 31
        %s1586 = scalar_select %p1585, %s1584, 31
        %s1587 = smul.addr %s1586, 8
        %s1588 = scalar_lea.vmem %s7, %s1587
        // Predicated region
        $region61: #{tpu_custom_call.1} parent=47 // pred_check
          %p1589 = pneg %p233
        $region62: #{tpu_custom_call.1} parent=47 // pred_check_branch
          %1591 = sbr.rel (%p1589) target = $region64
        $region63: #{tpu_custom_call.1} parent=47 // pred_region
          %s1592 = smul.u32 16, %s25
        $region64: #{tpu_custom_call.1} parent=47 // pred_fallthru
          _
      $region48: #{tpu_custom_call.1} parent=5 // pred_fallthru
        _
      %p1593 = scmp.le.s32.totalorder 2, %s16
      // Predicated region
      $region65: #{tpu_custom_call.1} parent=5 // pred_check
        %p1594 = pneg %p1593
      $region66: #{tpu_custom_call.1} parent=5 // pred_check_branch
        %1596 = sbr.rel (%p1594) target = $region68
      $region67: #{tpu_custom_call.1} parent=5 // pred_region
        %s1597 = ssub.s32 %s16, 2
        // Predicated region
        $region69: #{tpu_custom_call.1} parent=67 // pred_check
          %p1598 = pneg %p239
        $region70: #{tpu_custom_call.1} parent=67 // pred_check_branch
          %1600 = sbr.rel (%p1598) target = $region72
        $region71: #{tpu_custom_call.1} parent=67 // pred_region
          %s1601 = smul.u32 16, %s27
          %p1602 = scmp.lt.s32.totalorder %s1601, 31
          %s1603 = scalar_select %p1602, %s1601, 31
          %s1604 = smul.addr %s1603, 8
          %s1605 = scalar_lea.vmem %s7, %s1604
        $region72: #{tpu_custom_call.1} parent=67 // pred_fallthru
          _
      $region68: #{tpu_custom_call.1} parent=5 // pred_fallthru
        _
    $region6: #{tpu_custom_call.1} parent=1 // loop_footer
      %s20 = sadd.s32 1, %s16
    $region7: #{tpu_custom_call.1} parent=1 // loop_footer_branch
      %15 = sbr.rel target = $region3
    $region8: #{tpu_custom_call.1} parent=1 // loop_exit
      _
    %1606 = vsyncpa [#allocation7], 1
    %s1607 = scalar_lea.sflag [#allocation7], 1
    %1608 = vsyncpa %s1607, 1

</llo_original>
